<compile_context>
chip_gen: v6e
topology: v6e:2x2x1
jax: 0.10.0
libtpu: 0.0.40
codegen_flags: <defaults>
</compile_context>

<pallas_src>
import math

import jax
import jax.numpy as jnp
from jax.experimental import pallas as pl
from jax.experimental.pallas import tpu as pltpu

# ---------------- config (nn.Module defaults: heads=8, dim_head=16) ----------------
DIM = 32
HEADS = 8
DIM_HEAD = 16
INNER = HEADS * DIM_HEAD          # 128 -> lane-aligned
SCALE = DIM_HEAD ** (-0.5)
SEQ = 8
BATCH = 2


# ---------------- Pallas kernel: attention over a batch tile ----------------
def make_attention_kernel(heads, dim_head):
    inner = heads * dim_head

    def kernel(x_ref, wqkv_ref, wo_ref, bo_ref, o_ref):
        bt, n, dim = x_ref.shape                                  # static block shape

        # ---- shared-weight QKV projection over the whole flattened batch tile ----
        x = x_ref[...].reshape(bt * n, dim)                       # merge leading dims (no relayout)
        qkv = jnp.dot(x, wqkv_ref[...],
                      preferred_element_type=jnp.float32)         # (bt*n, 3*inner)

        # ---- gather heads into a single leading batch axis: (heads*bt, n, dim_head) ----
        # (scale is already folded into the q columns of wqkv by the wrapper)
        q_parts, k_parts, v_parts = [], [], []
        for h in range(heads):                                    # static unroll, slices only
            s0, s1 = h * dim_head, (h + 1) * dim_head
            q_parts.append(qkv[:, s0:s1].reshape(bt, n, dim_head))
            k_parts.append(qkv[:, inner + s0:inner + s1].reshape(bt, n, dim_head))
            v_parts.append(qkv[:, 2 * inner + s0:2 * inner + s1].reshape(bt, n, dim_head))
        q = jnp.concatenate(q_parts, axis=0)                      # leading-axis concat, index (h, b)
        k = jnp.concatenate(k_parts, axis=0)
        v = jnp.concatenate(v_parts, axis=0)

        # ---- TWO batched einsums + ONE softmax over all heads & samples ----
        sim = jnp.einsum('bid,bjd->bij', q, k,
                         preferred_element_type=jnp.float32)      # (heads*bt, n, n)
        sim = sim - jnp.max(sim, axis=-1, keepdims=True)
        e = jnp.exp(sim)
        attn = e * pl.reciprocal(jnp.sum(e, axis=-1, keepdims=True),
                                 approx=True)                     # EUP, off the VALU path
        out = jnp.einsum('bij,bjd->bid', attn, v,
                         preferred_element_type=jnp.float32)      # (heads*bt, n, dim_head)

        # ---- concat heads once, single output projection ----
        out = jnp.concatenate([out[h * bt:(h + 1) * bt] for h in range(heads)],
                              axis=-1)                            # (bt, n, inner)
        y = jnp.dot(out.reshape(bt * n, inner), wo_ref[...],
                    preferred_element_type=jnp.float32) + bo_ref[...]   # (bt*n, dim)

        # ---- lane-dense store: pack (bt, n, dim) -> (bt, 1, n*dim) explicitly ----
        y3 = y.reshape(bt, n, dim)                                # split leading dims only
        o_ref[...] = jnp.concatenate([y3[:, i:i + 1, :] for i in range(n)],
                                     axis=-1)                     # unmasked 256-lane block store

    return kernel


def attention_forward(x, wqkv, wo, bo, *, block_b=None):
    """x: (B, n, dim) f32. wqkv: (dim, 3*inner) (no bias). wo: (inner, dim). bo: (1, dim).

    Weights are stored [in, out]; PyTorch nn.Linear stores [out, in] (transpose
    when porting checkpoints).
    """
    B, n, dim = x.shape
    inner = INNER
    assert wqkv.shape == (dim, 3 * inner) and wo.shape == (inner, dim) and bo.shape == (1, dim)

    if block_b is None:
        # >= 2 grid steps whenever B >= 2 so the "parallel" axis can shard across
        # v7x's two TensorCores; cap block_b so per-step intermediates (qkv is
        # ~6 KiB/sample f32 plus head temps and double-buffered x/out tiles)
        # stay well inside v7x's 64 MiB VMEM.  On v6e (128 MiB) block_b can be
        # pushed ~2x larger with vmem_limit_bytes raised toward ~96 MiB.
        block_b = max(1, min(256, -(-B // 2)))
    pad = (-B) % block_b
    if pad:
        x = jnp.concatenate([x, jnp.zeros((pad, n, dim), x.dtype)], axis=0)
    bp = B + pad

    # Fold the attention scale into the q columns of W_qkv (one-time, free).
    wqkv_scaled = jnp.concatenate(
        [wqkv[:, :inner] * jnp.asarray(SCALE, wqkv.dtype), wqkv[:, inner:]], axis=1)

    # Advisory cost estimate for XLA's scheduler.
    flops = (2 * bp * n * dim * 3 * inner            # QKV projection
             + 4 * bp * HEADS * n * n * DIM_HEAD     # scores + attn@v
             + 2 * bp * n * inner * dim)             # output projection
    cost = pl.CostEstimate(
        flops=flops,
        transcendentals=bp * HEADS * n * n,          # exp in softmax
        bytes_accessed=4 * (2 * bp * n * dim + dim * 3 * inner + inner * dim + dim))

    kernel = make_attention_kernel(HEADS, DIM_HEAD)
    out = pl.pallas_call(
        kernel,
        # Lane-dense output: minor dim is n*dim = 256 (two full vregs wide).
        out_shape=jax.ShapeDtypeStruct((bp, 1, n * dim), jnp.float32),
        grid=(bp // block_b,),
        in_specs=[
            pl.BlockSpec((block_b, n, dim), lambda b: (b, 0, 0)),
            pl.BlockSpec(wqkv.shape, lambda b: (0, 0)),   # weights resident / replicated
            pl.BlockSpec(wo.shape, lambda b: (0, 0)),
            pl.BlockSpec(bo.shape, lambda b: (0, 0)),
        ],
        out_specs=pl.BlockSpec((block_b, 1, n * dim), lambda b: (b, 0, 0)),
        compiler_params=pltpu.CompilerParams(
            dimension_semantics=("parallel",),            # shard batch tiles over v7x's 2 TCs
            vmem_limit_bytes=32 * 1024 * 1024,            # above v5e's 16 MiB default; scale
        ),                                                # toward 96 MiB (v6e) / <=48 MiB (v7x)
        cost_estimate=cost,                               # only if block_b grows
    )(x, wqkv_scaled, wo, bo)
    return out[:B].reshape(B, n, dim)


# ---------------- pure-JAX reference (matches the PyTorch module) ----------------
def attention_ref(x, wqkv, wo, bo):
    B, n, dim = x.shape
    qkv = x @ wqkv
    q, k, v = jnp.split(qkv, 3, axis=-1)

    def split_heads(t):
        return t.reshape(B, n, HEADS, DIM_HEAD).transpose(0, 2, 1, 3)

    q, k, v = split_heads(q), split_heads(k), split_heads(v)
    sim = jnp.einsum('bhid,bhjd->bhij', q, k) * SCALE
    attn = jax.nn.softmax(sim, axis=-1)
    out = jnp.einsum('bhij,bhjd->bhid', attn, v)
    out = out.transpose(0, 2, 1, 3).reshape(B, n, INNER)
    return out @ wo + bo


if __name__ == "__main__":
    key = jax.random.PRNGKey(0)
    kx, kq, ko, kb = jax.random.split(key, 4)
    x = jax.random.normal(kx, (BATCH, SEQ, DIM), jnp.float32)
    wqkv = jax.random.normal(kq, (DIM, 3 * INNER), jnp.float32) / math.sqrt(DIM)
    wo = jax.random.normal(ko, (INNER, DIM), jnp.float32) / math.sqrt(INNER)
    bo = jax.random.normal(kb, (1, DIM), jnp.float32) * 0.1

    out = attention_forward(x, wqkv, wo, bo)
    out = jax.block_until_ready(out)

    assert out.shape == (BATCH, SEQ, DIM), out.shape
    assert bool(jnp.all(jnp.isfinite(out)))
    ref = attention_ref(x, wqkv, wo, bo)
    # 1e-2 tolerance: pl.reciprocal(approx=True) introduces ~1e-3-level relative error.
    assert bool(jnp.allclose(out, ref, rtol=1e-2, atol=1e-2)), \
        float(jnp.max(jnp.abs(out - ref)))
    print("KERNEL_OK")
</pallas_src>

<mosaic_0001>
module attributes {stable_mosaic.version = 11 : i64} {
  func.func @kernel(%arg0: i32, %arg1: memref<1x8x32xf32, #tpu.memory_space<vmem>>, %arg2: memref<32x384xf32, #tpu.memory_space<vmem>>, %arg3: memref<128x32xf32, #tpu.memory_space<vmem>>, %arg4: memref<1x32xf32, #tpu.memory_space<vmem>>, %arg5: memref<1x1x256xf32, #tpu.memory_space<vmem>>) attributes {dimension_semantics = [#tpu.dimension_semantics<parallel>], iteration_bounds = array<i64: 2>, scalar_prefetch = 0 : i64, scratch_operands = 0 : i64, tpu.core_type = #tpu.core_type<tc>, window_params = [{transform_indices = @transform_0, window_bounds = array<i64: 1, 8, 32>}, {pipeline_mode = #tpu.pipeline_mode<synchronous>, transform_indices = @transform_1, window_bounds = array<i64: 32, 384>}, {pipeline_mode = #tpu.pipeline_mode<synchronous>, transform_indices = @transform_2, window_bounds = array<i64: 128, 32>}, {pipeline_mode = #tpu.pipeline_mode<synchronous>, transform_indices = @transform_3, window_bounds = array<i64: 1, 32>}, {transform_indices = @transform_4, window_bounds = array<i64: 1, 1, 256>}]} {
    %c0 = arith.constant 0 : index
    %c0_0 = arith.constant 0 : index
    %c0_1 = arith.constant 0 : index
    %0 = vector.load %arg1[%c0, %c0_0, %c0_1] : memref<1x8x32xf32, #tpu.memory_space<vmem>>, vector<1x8x32xf32>
    %1 = vector.shape_cast %0 : vector<1x8x32xf32> to vector<8x32xf32>
    %c0_2 = arith.constant 0 : index
    %c0_3 = arith.constant 0 : index
    %2 = vector.load %arg2[%c0_2, %c0_3] : memref<32x384xf32, #tpu.memory_space<vmem>>, vector<32x384xf32>
    %cst = arith.constant dense<0.000000e+00> : vector<8x384xf32>
    %3 = tpu.matmul %1, %2, %cst {dimension_numbers = #tpu.dot_dimension_numbers<[1], [0], [0], [1], [0, 0, 1, 1], [], []>} : vector<8x32xf32>, vector<32x384xf32>, vector<8x384xf32> -> vector<8x384xf32>
    %4 = vector.extract_strided_slice %3 {offsets = [0, 0], sizes = [8, 16], strides = [1, 1]} : vector<8x384xf32> to vector<8x16xf32>
    %5 = vector.shape_cast %4 : vector<8x16xf32> to vector<1x8x16xf32>
    %6 = vector.extract_strided_slice %3 {offsets = [0, 128], sizes = [8, 16], strides = [1, 1]} : vector<8x384xf32> to vector<8x16xf32>
    %7 = vector.shape_cast %6 : vector<8x16xf32> to vector<1x8x16xf32>
    %8 = vector.extract_strided_slice %3 {offsets = [0, 256], sizes = [8, 16], strides = [1, 1]} : vector<8x384xf32> to vector<8x16xf32>
    %9 = vector.shape_cast %8 : vector<8x16xf32> to vector<1x8x16xf32>
    %10 = vector.extract_strided_slice %3 {offsets = [0, 16], sizes = [8, 16], strides = [1, 1]} : vector<8x384xf32> to vector<8x16xf32>
    %11 = vector.shape_cast %10 : vector<8x16xf32> to vector<1x8x16xf32>
    %12 = vector.extract_strided_slice %3 {offsets = [0, 144], sizes = [8, 16], strides = [1, 1]} : vector<8x384xf32> to vector<8x16xf32>
    %13 = vector.shape_cast %12 : vector<8x16xf32> to vector<1x8x16xf32>
    %14 = vector.extract_strided_slice %3 {offsets = [0, 272], sizes = [8, 16], strides = [1, 1]} : vector<8x384xf32> to vector<8x16xf32>
    %15 = vector.shape_cast %14 : vector<8x16xf32> to vector<1x8x16xf32>
    %16 = vector.extract_strided_slice %3 {offsets = [0, 32], sizes = [8, 16], strides = [1, 1]} : vector<8x384xf32> to vector<8x16xf32>
    %17 = vector.shape_cast %16 : vector<8x16xf32> to vector<1x8x16xf32>
    %18 = vector.extract_strided_slice %3 {offsets = [0, 160], sizes = [8, 16], strides = [1, 1]} : vector<8x384xf32> to vector<8x16xf32>
    %19 = vector.shape_cast %18 : vector<8x16xf32> to vector<1x8x16xf32>
    %20 = vector.extract_strided_slice %3 {offsets = [0, 288], sizes = [8, 16], strides = [1, 1]} : vector<8x384xf32> to vector<8x16xf32>
    %21 = vector.shape_cast %20 : vector<8x16xf32> to vector<1x8x16xf32>
    %22 = vector.extract_strided_slice %3 {offsets = [0, 48], sizes = [8, 16], strides = [1, 1]} : vector<8x384xf32> to vector<8x16xf32>
    %23 = vector.shape_cast %22 : vector<8x16xf32> to vector<1x8x16xf32>
    %24 = vector.extract_strided_slice %3 {offsets = [0, 176], sizes = [8, 16], strides = [1, 1]} : vector<8x384xf32> to vector<8x16xf32>
    %25 = vector.shape_cast %24 : vector<8x16xf32> to vector<1x8x16xf32>
    %26 = vector.extract_strided_slice %3 {offsets = [0, 304], sizes = [8, 16], strides = [1, 1]} : vector<8x384xf32> to vector<8x16xf32>
    %27 = vector.shape_cast %26 : vector<8x16xf32> to vector<1x8x16xf32>
    %28 = vector.extract_strided_slice %3 {offsets = [0, 64], sizes = [8, 16], strides = [1, 1]} : vector<8x384xf32> to vector<8x16xf32>
    %29 = vector.shape_cast %28 : vector<8x16xf32> to vector<1x8x16xf32>
    %30 = vector.extract_strided_slice %3 {offsets = [0, 192], sizes = [8, 16], strides = [1, 1]} : vector<8x384xf32> to vector<8x16xf32>
    %31 = vector.shape_cast %30 : vector<8x16xf32> to vector<1x8x16xf32>
    %32 = vector.extract_strided_slice %3 {offsets = [0, 320], sizes = [8, 16], strides = [1, 1]} : vector<8x384xf32> to vector<8x16xf32>
    %33 = vector.shape_cast %32 : vector<8x16xf32> to vector<1x8x16xf32>
    %34 = vector.extract_strided_slice %3 {offsets = [0, 80], sizes = [8, 16], strides = [1, 1]} : vector<8x384xf32> to vector<8x16xf32>
    %35 = vector.shape_cast %34 : vector<8x16xf32> to vector<1x8x16xf32>
    %36 = vector.extract_strided_slice %3 {offsets = [0, 208], sizes = [8, 16], strides = [1, 1]} : vector<8x384xf32> to vector<8x16xf32>
    %37 = vector.shape_cast %36 : vector<8x16xf32> to vector<1x8x16xf32>
    %38 = vector.extract_strided_slice %3 {offsets = [0, 336], sizes = [8, 16], strides = [1, 1]} : vector<8x384xf32> to vector<8x16xf32>
    %39 = vector.shape_cast %38 : vector<8x16xf32> to vector<1x8x16xf32>
    %40 = vector.extract_strided_slice %3 {offsets = [0, 96], sizes = [8, 16], strides = [1, 1]} : vector<8x384xf32> to vector<8x16xf32>
    %41 = vector.shape_cast %40 : vector<8x16xf32> to vector<1x8x16xf32>
    %42 = vector.extract_strided_slice %3 {offsets = [0, 224], sizes = [8, 16], strides = [1, 1]} : vector<8x384xf32> to vector<8x16xf32>
    %43 = vector.shape_cast %42 : vector<8x16xf32> to vector<1x8x16xf32>
    %44 = vector.extract_strided_slice %3 {offsets = [0, 352], sizes = [8, 16], strides = [1, 1]} : vector<8x384xf32> to vector<8x16xf32>
    %45 = vector.shape_cast %44 : vector<8x16xf32> to vector<1x8x16xf32>
    %46 = vector.extract_strided_slice %3 {offsets = [0, 112], sizes = [8, 16], strides = [1, 1]} : vector<8x384xf32> to vector<8x16xf32>
    %47 = vector.shape_cast %46 : vector<8x16xf32> to vector<1x8x16xf32>
    %48 = vector.extract_strided_slice %3 {offsets = [0, 240], sizes = [8, 16], strides = [1, 1]} : vector<8x384xf32> to vector<8x16xf32>
    %49 = vector.shape_cast %48 : vector<8x16xf32> to vector<1x8x16xf32>
    %50 = vector.extract_strided_slice %3 {offsets = [0, 368], sizes = [8, 16], strides = [1, 1]} : vector<8x384xf32> to vector<8x16xf32>
    %51 = vector.shape_cast %50 : vector<8x16xf32> to vector<1x8x16xf32>
    %52 = tpu.concatenate %5, %11, %17, %23, %29, %35, %41, %47 in 0 : vector<1x8x16xf32>, vector<1x8x16xf32>, vector<1x8x16xf32>, vector<1x8x16xf32>, vector<1x8x16xf32>, vector<1x8x16xf32>, vector<1x8x16xf32>, vector<1x8x16xf32> -> vector<8x8x16xf32>
    %53 = tpu.concatenate %7, %13, %19, %25, %31, %37, %43, %49 in 0 : vector<1x8x16xf32>, vector<1x8x16xf32>, vector<1x8x16xf32>, vector<1x8x16xf32>, vector<1x8x16xf32>, vector<1x8x16xf32>, vector<1x8x16xf32>, vector<1x8x16xf32> -> vector<8x8x16xf32>
    %54 = tpu.concatenate %9, %15, %21, %27, %33, %39, %45, %51 in 0 : vector<1x8x16xf32>, vector<1x8x16xf32>, vector<1x8x16xf32>, vector<1x8x16xf32>, vector<1x8x16xf32>, vector<1x8x16xf32>, vector<1x8x16xf32>, vector<1x8x16xf32> -> vector<8x8x16xf32>
    "tpu.trace_start"() <{level = 10 : i32, message = "bid,bjd->bij"}> : () -> ()
    %cst_4 = arith.constant dense<0.000000e+00> : vector<8x8x8xf32>
    %55 = tpu.matmul %52, %53, %cst_4 {dimension_numbers = #tpu.dot_dimension_numbers<[2], [2], [1], [1], [0, 0, 0, 1, 1, 1], [0], [0]>} : vector<8x8x16xf32>, vector<8x8x16xf32>, vector<8x8x8xf32> -> vector<8x8x8xf32>
    "tpu.trace_stop"() : () -> ()
    %cst_5 = arith.constant dense<0xFF800000> : vector<8x8xf32>
    %56 = vector.multi_reduction <maximumf>, %55, %cst_5 [2] : vector<8x8x8xf32> to vector<8x8xf32>
    %57 = vector.shape_cast %56 : vector<8x8xf32> to vector<8x8x1xf32>
    %58 = vector.broadcast %57 : vector<8x8x1xf32> to vector<8x8x8xf32>
    %59 = arith.subf %55, %58 : vector<8x8x8xf32>
    %60 = math.exp %59 : vector<8x8x8xf32>
    %cst_6 = arith.constant dense<0.000000e+00> : vector<8x8xf32>
    %61 = vector.multi_reduction <add>, %60, %cst_6 [2] : vector<8x8x8xf32> to vector<8x8xf32>
    %62 = vector.shape_cast %61 : vector<8x8xf32> to vector<8x8x1xf32>
    %63 = tpu.reciprocal %62 {approx = true} : vector<8x8x1xf32> -> vector<8x8x1xf32>
    %64 = vector.broadcast %63 : vector<8x8x1xf32> to vector<8x8x8xf32>
    %65 = arith.mulf %60, %64 : vector<8x8x8xf32>
    "tpu.trace_start"() <{level = 10 : i32, message = "bij,bjd->bid"}> : () -> ()
    %cst_7 = arith.constant dense<0.000000e+00> : vector<8x8x16xf32>
    %66 = tpu.matmul %65, %54, %cst_7 {dimension_numbers = #tpu.dot_dimension_numbers<[2], [1], [1], [2], [0, 0, 0, 1, 1, 2], [0], [0]>} : vector<8x8x8xf32>, vector<8x8x16xf32>, vector<8x8x16xf32> -> vector<8x8x16xf32>
    "tpu.trace_stop"() : () -> ()
    %67 = vector.extract_strided_slice %66 {offsets = [0, 0, 0], sizes = [1, 8, 16], strides = [1, 1, 1]} : vector<8x8x16xf32> to vector<1x8x16xf32>
    %68 = vector.extract_strided_slice %66 {offsets = [1, 0, 0], sizes = [1, 8, 16], strides = [1, 1, 1]} : vector<8x8x16xf32> to vector<1x8x16xf32>
    %69 = vector.extract_strided_slice %66 {offsets = [2, 0, 0], sizes = [1, 8, 16], strides = [1, 1, 1]} : vector<8x8x16xf32> to vector<1x8x16xf32>
    %70 = vector.extract_strided_slice %66 {offsets = [3, 0, 0], sizes = [1, 8, 16], strides = [1, 1, 1]} : vector<8x8x16xf32> to vector<1x8x16xf32>
    %71 = vector.extract_strided_slice %66 {offsets = [4, 0, 0], sizes = [1, 8, 16], strides = [1, 1, 1]} : vector<8x8x16xf32> to vector<1x8x16xf32>
    %72 = vector.extract_strided_slice %66 {offsets = [5, 0, 0], sizes = [1, 8, 16], strides = [1, 1, 1]} : vector<8x8x16xf32> to vector<1x8x16xf32>
    %73 = vector.extract_strided_slice %66 {offsets = [6, 0, 0], sizes = [1, 8, 16], strides = [1, 1, 1]} : vector<8x8x16xf32> to vector<1x8x16xf32>
    %74 = vector.extract_strided_slice %66 {offsets = [7, 0, 0], sizes = [1, 8, 16], strides = [1, 1, 1]} : vector<8x8x16xf32> to vector<1x8x16xf32>
    %75 = tpu.concatenate %67, %68, %69, %70, %71, %72, %73, %74 in 2 : vector<1x8x16xf32>, vector<1x8x16xf32>, vector<1x8x16xf32>, vector<1x8x16xf32>, vector<1x8x16xf32>, vector<1x8x16xf32>, vector<1x8x16xf32>, vector<1x8x16xf32> -> vector<1x8x128xf32>
    %76 = vector.shape_cast %75 : vector<1x8x128xf32> to vector<8x128xf32>
    %c0_8 = arith.constant 0 : index
    %c0_9 = arith.constant 0 : index
    %77 = vector.load %arg3[%c0_8, %c0_9] : memref<128x32xf32, #tpu.memory_space<vmem>>, vector<128x32xf32>
    %cst_10 = arith.constant dense<0.000000e+00> : vector<8x32xf32>
    %78 = tpu.matmul %76, %77, %cst_10 {dimension_numbers = #tpu.dot_dimension_numbers<[1], [0], [0], [1], [0, 0, 1, 1], [], []>} : vector<8x128xf32>, vector<128x32xf32>, vector<8x32xf32> -> vector<8x32xf32>
    %c0_11 = arith.constant 0 : index
    %c0_12 = arith.constant 0 : index
    %79 = vector.load %arg4[%c0_11, %c0_12] : memref<1x32xf32, #tpu.memory_space<vmem>>, vector<1x32xf32>
    %80 = vector.broadcast %79 : vector<1x32xf32> to vector<8x32xf32>
    %81 = arith.addf %78, %80 : vector<8x32xf32>
    %82 = vector.shape_cast %81 : vector<8x32xf32> to vector<1x8x32xf32>
    %83 = vector.extract_strided_slice %82 {offsets = [0, 0, 0], sizes = [1, 1, 32], strides = [1, 1, 1]} : vector<1x8x32xf32> to vector<1x1x32xf32>
    %84 = vector.extract_strided_slice %82 {offsets = [0, 1, 0], sizes = [1, 1, 32], strides = [1, 1, 1]} : vector<1x8x32xf32> to vector<1x1x32xf32>
    %85 = vector.extract_strided_slice %82 {offsets = [0, 2, 0], sizes = [1, 1, 32], strides = [1, 1, 1]} : vector<1x8x32xf32> to vector<1x1x32xf32>
    %86 = vector.extract_strided_slice %82 {offsets = [0, 3, 0], sizes = [1, 1, 32], strides = [1, 1, 1]} : vector<1x8x32xf32> to vector<1x1x32xf32>
    %87 = vector.extract_strided_slice %82 {offsets = [0, 4, 0], sizes = [1, 1, 32], strides = [1, 1, 1]} : vector<1x8x32xf32> to vector<1x1x32xf32>
    %88 = vector.extract_strided_slice %82 {offsets = [0, 5, 0], sizes = [1, 1, 32], strides = [1, 1, 1]} : vector<1x8x32xf32> to vector<1x1x32xf32>
    %89 = vector.extract_strided_slice %82 {offsets = [0, 6, 0], sizes = [1, 1, 32], strides = [1, 1, 1]} : vector<1x8x32xf32> to vector<1x1x32xf32>
    %90 = vector.extract_strided_slice %82 {offsets = [0, 7, 0], sizes = [1, 1, 32], strides = [1, 1, 1]} : vector<1x8x32xf32> to vector<1x1x32xf32>
    %91 = tpu.concatenate %83, %84, %85, %86, %87, %88, %89, %90 in 2 : vector<1x1x32xf32>, vector<1x1x32xf32>, vector<1x1x32xf32>, vector<1x1x32xf32>, vector<1x1x32xf32>, vector<1x1x32xf32>, vector<1x1x32xf32>, vector<1x1x32xf32> -> vector<1x1x256xf32>
    %c0_13 = arith.constant 0 : index
    %c0_14 = arith.constant 0 : index
    %c0_15 = arith.constant 0 : index
    %92 = vector.load %arg5[%c0_13, %c0_14, %c0_15] : memref<1x1x256xf32, #tpu.memory_space<vmem>>, vector<1x1x256xf32>
    tpu.vector_store %arg5[%c0_13, %c0_14, %c0_15], %91 {strides = array<i32>} : memref<1x1x256xf32, #tpu.memory_space<vmem>>, vector<1x1x256xf32>,
    return
  }
  func.func @transform_0(%arg0: i32) -> (i32, i32, i32) {
    %c0_i32 = arith.constant 0 : i32
    %c0_i32_0 = arith.constant 0 : i32
    %c0_i32_1 = arith.constant 0 : i32
    return %arg0, %c0_i32, %c0_i32_0 : i32, i32, i32
  }
  func.func @transform_1(%arg0: i32) -> (i32, i32) {
    %c0_i32 = arith.constant 0 : i32
    %c0_i32_0 = arith.constant 0 : i32
    %c0_i32_1 = arith.constant 0 : i32
    return %c0_i32, %c0_i32_0 : i32, i32
  }
  func.func @transform_2(%arg0: i32) -> (i32, i32) {
    %c0_i32 = arith.constant 0 : i32
    %c0_i32_0 = arith.constant 0 : i32
    %c0_i32_1 = arith.constant 0 : i32
    return %c0_i32, %c0_i32_0 : i32, i32
  }
  func.func @transform_3(%arg0: i32) -> (i32, i32) {
    %c0_i32 = arith.constant 0 : i32
    %c0_i32_0 = arith.constant 0 : i32
    %c0_i32_1 = arith.constant 0 : i32
    return %c0_i32, %c0_i32_0 : i32, i32
  }
  func.func @transform_4(%arg0: i32) -> (i32, i32, i32) {
    %c0_i32 = arith.constant 0 : i32
    %c0_i32_0 = arith.constant 0 : i32
    %c0_i32_1 = arith.constant 0 : i32
    return %arg0, %c0_i32, %c0_i32_0 : i32, i32, i32
  }
}

</mosaic_0001>

<llo_original>
// kernel: tpu_custom_call.1
$region0: #{tpu_custom_call.1}
  #allocation0 [shape = 'u32[]', space=smem, size = 0x4, offset = 0x4, fixed_abs, tag = 'smem constant byte address 0x4 - core index']
  #allocation1 [shape = 'u32[144,128]{1,0:T(1,128)}', space=vmem, size = 0x12000, scoped, tag = 'internal scratch']
  %s0 = inlined_call_operand.vmem [shape: f32[2,8,32], index: 0, kind: input, shape index: {}]
  %s1 = inlined_call_operand.vmem [shape: f32[32,384], index: 1, kind: input, shape index: {}]
  %s2 = inlined_call_operand.vmem [shape: f32[128,32], index: 2, kind: input, shape index: {}]
  %s3 = inlined_call_operand.vmem [shape: f32[1,32], index: 3, kind: input, shape index: {}]
  %s4 = inlined_call_operand.hbm [shape: f32[2,1,256], index: 4, kind: output, shape index: {}]
  %s5 = sld [smem:[#allocation0]]
  $region49: #{tpu_custom_call.1} parent=0
    _
  %s7 = ssub.s32 1, %s5
  %s8 = scalar_select 0, %s7, %s5
  $region1: #{tpu_custom_call.1} parent=0
    #allocation2 [shape = 'u8[2048]{0}', space=vmem, size = 0x800, scoped, tag = 'output window, operand 0']
    #allocation3 [shape = 's32[2]{0}', space=sflag, size = 0x8, scoped, tag = 'scoped memory for tpu_custom_call.1']
    %9 = vsyncpa [#allocation3], 0
    %s10 = scalar_lea.sflag [#allocation3], 1
    %11 = vsyncpa %s10, 0
    loop: start=0, step=1, limit=4
    $region2: #{tpu_custom_call.1} parent=1 // loop_pre_header
      _
    $region3: #{tpu_custom_call.1} parent=1 // loop_header
      %s13 = sphi 0, %s17
      %p14 = scmp.ge.s32.totalorder %s13, 4
      %s23 = sphi 0, %s25
      %s26 = sphi 0, %s23
      %s27 = sphi 0, %s26
      %s43 = sphi 0, %s27
      %s47 = sphi 0, %s47
      %s49 = sphi 0, %s47
      %s50 = sphi 0, %s49
      %s64 = sphi 0, %s50
      %s68 = sphi 0, %s68
      %s70 = sphi 0, %s68
      %s71 = sphi 0, %s70
      %s85 = sphi 0, %s71
      %s89 = sphi 0, %s89
      %s91 = sphi 0, %s89
      %s92 = sphi 0, %s91
      %s106 = sphi 0, %s92
      %s112 = sphi 0, %s114
      %s115 = sphi 0, %s112
      %s116 = sphi 0, %s115
      %s132 = sphi 0, %s116
    $region4: #{tpu_custom_call.1} parent=1 // loop_header_branch
      %16 = sbr.rel (%p14) target = $region8
    $region5: #{tpu_custom_call.1} parent=1 // loop_body
      %s18 = ssub.s32 %s13, 1
      %s19 = ssub.s32 %s13, 2
      %s20 = sadd.s32 %s13, 1
      %s21 = ssub.s32 %s13, %s20
      %p22 = scmp.eq.s32.totalorder %s21, 0
      %s24 = sadd.s32 %s23, 1
      %s25 = scalar_select %p22, %s23, %s24
      %p28 = pneg %p22
      %p29 = scmp.eq.s32.totalorder %s13, 1
      %p30 = por %p28, %p29
      %p31 = scmp.ne.s32.totalorder %s23, %s26
      %p32 = scmp.eq.s32.totalorder %s13, 0
      %p33 = por %p31, %p32
      %p34 = scmp.ne.s32.totalorder %s23, %s26
      %p35 = scmp.eq.s32.totalorder %s18, 1
      %p36 = por %p34, %p35
      %p37 = scmp.ne.s32.totalorder %s26, %s27
      %p38 = scmp.eq.s32.totalorder %s18, 0
      %p39 = por %p37, %p38
      %p40 = scmp.ne.s32.totalorder %s26, %s27
      %p41 = scmp.eq.s32.totalorder %s19, 1
      %p42 = por %p40, %p41
      %p44 = scmp.ne.s32.totalorder %s27, %s43
      %p45 = scmp.eq.s32.totalorder %s19, 0
      %p46 = por %p44, %p45
      %s48 = sadd.s32 %s47, 1
      %p51 = scmp.eq.s32.totalorder %s13, 1
      %p52 = scmp.ne.s32.totalorder %s47, %s49
      %p53 = scmp.eq.s32.totalorder %s13, 0
      %p54 = por %p52, %p53
      %p55 = scmp.ne.s32.totalorder %s47, %s49
      %p56 = scmp.eq.s32.totalorder %s18, 1
      %p57 = por %p55, %p56
      %p58 = scmp.ne.s32.totalorder %s49, %s50
      %p59 = scmp.eq.s32.totalorder %s18, 0
      %p60 = por %p58, %p59
      %p61 = scmp.ne.s32.totalorder %s49, %s50
      %p62 = scmp.eq.s32.totalorder %s19, 1
      %p63 = por %p61, %p62
      %p65 = scmp.ne.s32.totalorder %s50, %s64
      %p66 = scmp.eq.s32.totalorder %s19, 0
      %p67 = por %p65, %p66
      %s69 = sadd.s32 %s68, 1
      %p72 = scmp.eq.s32.totalorder %s13, 1
      %p73 = scmp.ne.s32.totalorder %s68, %s70
      %p74 = scmp.eq.s32.totalorder %s13, 0
      %p75 = por %p73, %p74
      %p76 = scmp.ne.s32.totalorder %s68, %s70
      %p77 = scmp.eq.s32.totalorder %s18, 1
      %p78 = por %p76, %p77
      %p79 = scmp.ne.s32.totalorder %s70, %s71
      %p80 = scmp.eq.s32.totalorder %s18, 0
      %p81 = por %p79, %p80
      %p82 = scmp.ne.s32.totalorder %s70, %s71
      %p83 = scmp.eq.s32.totalorder %s19, 1
      %p84 = por %p82, %p83
      %p86 = scmp.ne.s32.totalorder %s71, %s85
      %p87 = scmp.eq.s32.totalorder %s19, 0
      %p88 = por %p86, %p87
      %s90 = sadd.s32 %s89, 1
      %p93 = scmp.eq.s32.totalorder %s13, 1
      %p94 = scmp.ne.s32.totalorder %s89, %s91
      %p95 = scmp.eq.s32.totalorder %s13, 0
      %p96 = por %p94, %p95
      %p97 = scmp.ne.s32.totalorder %s89, %s91
      %p98 = scmp.eq.s32.totalorder %s18, 1
      %p99 = por %p97, %p98
      %p100 = scmp.ne.s32.totalorder %s91, %s92
      %p101 = scmp.eq.s32.totalorder %s18, 0
      %p102 = por %p100, %p101
      %p103 = scmp.ne.s32.totalorder %s91, %s92
      %p104 = scmp.eq.s32.totalorder %s19, 1
      %p105 = por %p103, %p104
      %p107 = scmp.ne.s32.totalorder %s92, %s106
      %p108 = scmp.eq.s32.totalorder %s19, 0
      %p109 = por %p107, %p108
      %s110 = ssub.s32 %s13, %s20
      %p111 = scmp.eq.s32.totalorder %s110, 0
      %s113 = sadd.s32 %s112, 1
      %s114 = scalar_select %p111, %s112, %s113
      %p117 = pneg %p111
      %p118 = scmp.eq.s32.totalorder %s13, 1
      %p119 = por %p117, %p118
      %p120 = scmp.ne.s32.totalorder %s112, %s115
      %p121 = scmp.eq.s32.totalorder %s13, 0
      %p122 = por %p120, %p121
      %p123 = scmp.ne.s32.totalorder %s112, %s115
      %p124 = scmp.eq.s32.totalorder %s18, 1
      %p125 = por %p123, %p124
      %p126 = scmp.ne.s32.totalorder %s115, %s116
      %p127 = scmp.eq.s32.totalorder %s18, 0
      %p128 = por %p126, %p127
      %p129 = scmp.ne.s32.totalorder %s115, %s116
      %p130 = scmp.eq.s32.totalorder %s19, 1
      %p131 = por %p129, %p130
      %p133 = scmp.ne.s32.totalorder %s116, %s132
      %p134 = scmp.eq.s32.totalorder %s19, 0
      %p135 = por %p133, %p134
      %p136 = scmp.le.s32.totalorder 1, %s13
      %p137 = scmp.lt.s32.totalorder %s13, 3
      %p138 = pnand %p136, %p137
      %p139 = pneg %p138
      // Predicated region
      $region9: #{tpu_custom_call.1} parent=5 // pred_check
        _
      $region10: #{tpu_custom_call.1} parent=5 // pred_check_branch
        %141 = sbr.rel (%p138) target = $region12
      $region11: #{tpu_custom_call.1} parent=5 // pred_region
        %s142 = ssub.s32 %s13, 1
        // Predicated region
        $region13: #{tpu_custom_call.1} parent=11 // pred_check
          %p143 = pneg %p60
        $region14: #{tpu_custom_call.1} parent=11 // pred_check_branch
          %145 = sbr.rel (%p143) target = $region16
        $region15: #{tpu_custom_call.1} parent=11 // pred_region
          _
        $region16: #{tpu_custom_call.1} parent=11 // pred_fallthru
          _
        // Predicated region
        $region17: #{tpu_custom_call.1} parent=11 // pred_check
          %p146 = pneg %p81
        $region18: #{tpu_custom_call.1} parent=11 // pred_check_branch
          %148 = sbr.rel (%p146) target = $region20
        $region19: #{tpu_custom_call.1} parent=11 // pred_region
          _
        $region20: #{tpu_custom_call.1} parent=11 // pred_fallthru
          _
        // Predicated region
        $region21: #{tpu_custom_call.1} parent=11 // pred_check
          %p149 = pneg %p102
        $region22: #{tpu_custom_call.1} parent=11 // pred_check_branch
          %151 = sbr.rel (%p149) target = $region24
        $region23: #{tpu_custom_call.1} parent=11 // pred_region
          _
        $region24: #{tpu_custom_call.1} parent=11 // pred_fallthru
          _
      $region12: #{tpu_custom_call.1} parent=5 // pred_fallthru
        _
      %p152 = scmp.lt.s32.totalorder %s13, 2
      // Predicated region
      $region25: #{tpu_custom_call.1} parent=5 // pred_check
        %p153 = pneg %p152
      $region26: #{tpu_custom_call.1} parent=5 // pred_check_branch
        %155 = sbr.rel (%p153) target = $region28
      $region27: #{tpu_custom_call.1} parent=5 // pred_region
        // Predicated region
        $region29: #{tpu_custom_call.1} parent=27 // pred_check
          %p156 = pneg %p33
        $region30: #{tpu_custom_call.1} parent=27 // pred_check_branch
          %158 = sbr.rel (%p156) target = $region32
        $region31: #{tpu_custom_call.1} parent=27 // pred_region
          %p159 = scmp.lt.s32.totalorder %s13, 1
          %s160 = scalar_select %p159, %s13, 1
          %s161 = smul.addr %s160, 8
          %s162 = scalar_lea.vmem %s0, %s161
        $region32: #{tpu_custom_call.1} parent=27 // pred_fallthru
          _
      $region28: #{tpu_custom_call.1} parent=5 // pred_fallthru
        _
      %p163 = scmp.le.s32.totalorder 1, %s13
      %p164 = scmp.lt.s32.totalorder %s13, 3
      %p165 = pnand %p163, %p164
      %p166 = pneg %p165
      // Predicated region
      $region33: #{tpu_custom_call.1} parent=5 // pred_check
        _
      $region34: #{tpu_custom_call.1} parent=5 // pred_check_branch
        %168 = sbr.rel (%p165) target = $region36
      $region35: #{tpu_custom_call.1} parent=5 // pred_region
        %s169 = ssub.s32 %s13, 1
        %p170 = scmp.lt.s32.totalorder %s18, 1
        %s171 = scalar_select %p170, %s18, 1
        %s172 = smul.addr %s171, 8
        %s173 = scalar_lea.vmem %s0, %s172
        %p174 = pneg %p39
        %p175 = pneg %p36
        %p176 = pneg %p60
        %p177 = pneg %p57
        %p178 = pneg %p81
        %p179 = pneg %p78
        %p180 = pneg %p102
        %p181 = pneg %p99
        %p182 = pneg %p128
        %p183 = pneg %p125
        %s184 = sand.u32 %s115, 1
        %s185 = scalar_lea.sflag [#allocation3], %s184
        %s186 = sand.u32 %s115, 1
        %s187 = smul.addr %s186, 2
        %s188 = scalar_lea.vmem [#allocation2], %s187
        %p189 = scmp.lt.s32.totalorder %s18, 1
        %s190 = scalar_select %p189, %s18, 1
        %s191 = smul.addr %s190, 8
        %s192 = scalar_lea.vmem %s0, %s191
        %v193 = vld [vmem:[%s192] sm:$0xff]
        %v194 = vld [vmem:[%s1] sm:$0xff]
        %v195 = vld [vmem:[%s1 + $0x8] sm:$0xff]
        %v196 = vld [vmem:[%s1 + $0x10] sm:$0xff]
        %v197 = vld [vmem:[%s1 + $0x18] sm:$0xff]
        %v198 = vld [vmem:[%s1 + $0x20] sm:$0xff]
        %v199 = vld [vmem:[%s1 + $0x28] sm:$0xff]
        %v200 = vld [vmem:[%s1 + $0x30] sm:$0xff]
        %v201 = vld [vmem:[%s1 + $0x38] sm:$0xff]
        %v202 = vld [vmem:[%s1 + $0x40] sm:$0xff]
        %v203 = vld [vmem:[%s1 + $0x48] sm:$0xff]
        %v204 = vld [vmem:[%s1 + $0x50] sm:$0xff]
        %v205 = vld [vmem:[%s1 + $0x58] sm:$0xff]
        %vm206 = vcmask 261120
        %v208 = vsel %vm206, %v193, 0
        %210 = vmatprep.subr.mxu0 0.0
        %211 = vmatpush1.msra.mxu0 0.0
        %212 = vmatprep.subr.mxu0 0.0
        %213 = vmatpush1.msra.mxu0 0.0
        %214 = vmatprep.subr.mxu0 0.0
        %215 = vmatpush1.msra.mxu0 0.0
        %216 = vmatprep.subr.mxu0 0.0
        %217 = vmatpush1.msra.mxu0 0.0
        %218 = vmatprep.subr.mxu0 0.0
        %219 = vmatpush1.msra.mxu0 0.0
        %220 = vmatprep.subr.mxu0 0.0
        %221 = vmatpush1.msra.mxu0 0.0
        %222 = vmatprep.subr.mxu0 0.0
        %223 = vmatpush1.msra.mxu0 0.0
        %224 = vmatprep.subr.mxu0 0.0
        %225 = vmatpush1.msra.mxu0 0.0
        %226 = vmatprep.subr.mxu0 0.0
        %227 = vmatpush1.msra.mxu0 0.0
        %228 = vmatprep.subr.mxu0 0.0
        %229 = vmatpush1.msra.mxu0 0.0
        %230 = vmatprep.subr.mxu0 0.0
        %231 = vmatpush1.msra.mxu0 0.0
        %232 = vmatprep.subr.mxu0 0.0
        %233 = vmatpush1.msra.mxu0 0.0
        %234 = vmatprep.subr.mxu0 %v204
        %235 = vmatpush1.msra.mxu0 %v203
        %236 = vmatprep.subr.mxu0 %v201
        %237 = vmatpush1.msra.mxu0 %v200
        %238 = vmatprep.subr.mxu0 %v198
        %239 = vmatpush1.msra.mxu0 %v197
        %240 = vmatprep.subr.mxu0 %v195
        %241 = vmatpush1.msra.mxu0 %v194
        %242 = vmatprep.subr.mxu0 0.0
        %243 = vmatpush2.msra.mxu0 0.0
        %244 = vmatprep.subr.mxu0 0.0
        %245 = vmatpush2.msra.mxu0 0.0
        %246 = vmatprep.subr.mxu0 0.0
        %247 = vmatpush2.msra.mxu0 0.0
        %248 = vmatprep.subr.mxu0 0.0
        %249 = vmatpush2.msra.mxu0 0.0
        %250 = vmatprep.subr.mxu0 0.0
        %251 = vmatpush2.msra.mxu0 0.0
        %252 = vmatprep.subr.mxu0 0.0
        %253 = vmatpush2.msra.mxu0 0.0
        %254 = vmatprep.subr.mxu0 0.0
        %255 = vmatpush2.msra.mxu0 0.0
        %256 = vmatprep.subr.mxu0 0.0
        %257 = vmatpush2.msra.mxu0 0.0
        %258 = vmatprep.subr.mxu0 0.0
        %259 = vmatpush2.msra.mxu0 0.0
        %260 = vmatprep.subr.mxu0 0.0
        %261 = vmatpush2.msra.mxu0 0.0
        %262 = vmatprep.subr.mxu0 0.0
        %263 = vmatpush2.msra.mxu0 0.0
        %264 = vmatprep.subr.mxu0 0.0
        %265 = vmatpush2.msra.mxu0 0.0
        %266 = vmatprep.subr.mxu0 0.0
        %267 = vmatpush2.msra.mxu0 0.0
        %268 = vmatprep.subr.mxu0 0.0
        %269 = vmatpush2.msra.mxu0 0.0
        %270 = vmatprep.subr.mxu0 0.0
        %271 = vmatpush2.msra.mxu0 0.0
        %272 = vmatprep.subr.mxu0 0.0
        %273 = vmatpush2.msra.mxu0 0.0
        %274 = vmatprep.mubr.f32.mxu0 0.0
        %275 = vmatmul.mubr.f32.gmra.mxu0 %v208
        %v276 = vpop.f32.mrf.mxu0
        %v277 = vadd.f32 0.0, %v276
        %v278 = vpop.f32.mrf.mxu0
        %v279 = vadd.f32 0.0, %v278
        %280 = vdwg.mxu0
        %281 = vmatprep.subr.mxu0 0.0
        %282 = vmatpush1.msra.mxu0 0.0
        %283 = vmatprep.subr.mxu0 0.0
        %284 = vmatpush1.msra.mxu0 0.0
        %285 = vmatprep.subr.mxu0 0.0
        %286 = vmatpush1.msra.mxu0 0.0
        %287 = vmatprep.subr.mxu0 0.0
        %288 = vmatpush1.msra.mxu0 0.0
        %289 = vmatprep.subr.mxu0 0.0
        %290 = vmatpush1.msra.mxu0 0.0
        %291 = vmatprep.subr.mxu0 0.0
        %292 = vmatpush1.msra.mxu0 0.0
        %293 = vmatprep.subr.mxu0 0.0
        %294 = vmatpush1.msra.mxu0 0.0
        %295 = vmatprep.subr.mxu0 0.0
        %296 = vmatpush1.msra.mxu0 0.0
        %297 = vmatprep.subr.mxu0 0.0
        %298 = vmatpush1.msra.mxu0 0.0
        %299 = vmatprep.subr.mxu0 0.0
        %300 = vmatpush1.msra.mxu0 0.0
        %301 = vmatprep.subr.mxu0 0.0
        %302 = vmatpush1.msra.mxu0 0.0
        %303 = vmatprep.subr.mxu0 0.0
        %304 = vmatpush1.msra.mxu0 0.0
        %305 = vmatprep.subr.mxu0 0.0
        %306 = vmatpush1.msra.mxu0 %v205
        %307 = vmatprep.subr.mxu0 0.0
        %308 = vmatpush1.msra.mxu0 %v202
        %309 = vmatprep.subr.mxu0 0.0
        %310 = vmatpush1.msra.mxu0 %v199
        %311 = vmatprep.subr.mxu0 0.0
        %312 = vmatpush1.msra.mxu0 %v196
        %313 = vmatprep.subr.mxu0 0.0
        %314 = vmatpush2.msra.mxu0 0.0
        %315 = vmatprep.subr.mxu0 0.0
        %316 = vmatpush2.msra.mxu0 0.0
        %317 = vmatprep.subr.mxu0 0.0
        %318 = vmatpush2.msra.mxu0 0.0
        %319 = vmatprep.subr.mxu0 0.0
        %320 = vmatpush2.msra.mxu0 0.0
        %321 = vmatprep.subr.mxu0 0.0
        %322 = vmatpush2.msra.mxu0 0.0
        %323 = vmatprep.subr.mxu0 0.0
        %324 = vmatpush2.msra.mxu0 0.0
        %325 = vmatprep.subr.mxu0 0.0
        %326 = vmatpush2.msra.mxu0 0.0
        %327 = vmatprep.subr.mxu0 0.0
        %328 = vmatpush2.msra.mxu0 0.0
        %329 = vmatprep.subr.mxu0 0.0
        %330 = vmatpush2.msra.mxu0 0.0
        %331 = vmatprep.subr.mxu0 0.0
        %332 = vmatpush2.msra.mxu0 0.0
        %333 = vmatprep.subr.mxu0 0.0
        %334 = vmatpush2.msra.mxu0 0.0
        %335 = vmatprep.subr.mxu0 0.0
        %336 = vmatpush2.msra.mxu0 0.0
        %337 = vmatprep.subr.mxu0 0.0
        %338 = vmatpush2.msra.mxu0 0.0
        %339 = vmatprep.subr.mxu0 0.0
        %340 = vmatpush2.msra.mxu0 0.0
        %341 = vmatprep.subr.mxu0 0.0
        %342 = vmatpush2.msra.mxu0 0.0
        %343 = vmatprep.subr.mxu0 0.0
        %344 = vmatpush2.msra.mxu0 0.0
        %345 = vmatprep.mubr.f32.mxu0 0.0
        %346 = vmatmul.mubr.f32.gmra.mxu0 %v208
        %v347 = vpop.f32.mrf.mxu0
        %v348 = vadd.f32 0.0, %v347
        %v349 = vpop.f32.mrf.mxu0
        %350 = vdwg.mxu0
        %352 = vrot.lane.b32.xlu0 %v277, 112
        %v353 = vpop.permute.xlu0 %352
        %354 = vrot.lane.b32.xlu0 %v277, 96
        %v355 = vpop.permute.xlu0 %354
        %356 = vrot.lane.b32.xlu0 %v277, 80
        %v357 = vpop.permute.xlu0 %356
        %358 = vrot.lane.b32.xlu0 %v277, 64
        %v359 = vpop.permute.xlu0 %358
        %360 = vrot.lane.b32.xlu0 %v277, 48
        %v361 = vpop.permute.xlu0 %360
        %362 = vrot.lane.b32.xlu0 %v277, 32
        %v363 = vpop.permute.xlu0 %362
        %364 = vrot.lane.b32.xlu0 %v277, 16
        %v365 = vpop.permute.xlu0 %364
        %367 = vrot.lane.b32.xlu0 %v279, 112
        %v368 = vpop.permute.xlu0 %367
        %369 = vrot.lane.b32.xlu0 %v279, 96
        %v370 = vpop.permute.xlu0 %369
        %371 = vrot.lane.b32.xlu0 %v279, 80
        %v372 = vpop.permute.xlu0 %371
        %373 = vrot.lane.b32.xlu0 %v279, 64
        %v374 = vpop.permute.xlu0 %373
        %375 = vrot.lane.b32.xlu0 %v279, 48
        %v376 = vpop.permute.xlu0 %375
        %377 = vrot.lane.b32.xlu0 %v279, 32
        %v378 = vpop.permute.xlu0 %377
        %379 = vrot.lane.b32.xlu0 %v279, 16
        %v380 = vpop.permute.xlu0 %379
        %382 = vrot.lane.b32.xlu0 %v348, 112
        %v383 = vpop.permute.xlu0 %382
        %385 = vrot.lane.b32.xlu0 %v348, 96
        %v386 = vpop.permute.xlu0 %385
        %388 = vrot.lane.b32.xlu0 %v348, 80
        %v389 = vpop.permute.xlu0 %388
        %391 = vrot.lane.b32.xlu0 %v348, 64
        %v392 = vpop.permute.xlu0 %391
        %394 = vrot.lane.b32.xlu0 %v348, 48
        %v395 = vpop.permute.xlu0 %394
        %397 = vrot.lane.b32.xlu0 %v348, 32
        %v398 = vpop.permute.xlu0 %397
        %400 = vrot.lane.b32.xlu0 %v348, 16
        %v401 = vpop.permute.xlu0 %400
        %vm403 = vcmask 130048
        %v404 = vsel %vm403, %v277, 0
        %v406 = vsel %vm403, %v279, 0
        %408 = vmatprep.subr.mxu0 0.0
        %409 = vmatpush1.xpose.msra.mxu0 0.0
        %410 = vmatprep.subr.mxu0 0.0
        %411 = vmatpush1.xpose.msra.mxu0 0.0
        %412 = vmatprep.subr.mxu0 0.0
        %413 = vmatpush1.xpose.msra.mxu0 0.0
        %414 = vmatprep.subr.mxu0 0.0
        %415 = vmatpush1.xpose.msra.mxu0 0.0
        %416 = vmatprep.subr.mxu0 0.0
        %417 = vmatpush1.xpose.msra.mxu0 0.0
        %418 = vmatprep.subr.mxu0 0.0
        %419 = vmatpush1.xpose.msra.mxu0 0.0
        %420 = vmatprep.subr.mxu0 0.0
        %421 = vmatpush1.xpose.msra.mxu0 0.0
        %422 = vmatprep.subr.mxu0 0.0
        %423 = vmatpush1.xpose.msra.mxu0 0.0
        %424 = vmatprep.subr.mxu0 0.0
        %425 = vmatpush1.xpose.msra.mxu0 0.0
        %426 = vmatprep.subr.mxu0 0.0
        %427 = vmatpush1.xpose.msra.mxu0 0.0
        %428 = vmatprep.subr.mxu0 0.0
        %429 = vmatpush1.xpose.msra.mxu0 0.0
        %430 = vmatprep.subr.mxu0 0.0
        %431 = vmatpush1.xpose.msra.mxu0 0.0
        %432 = vmatprep.subr.mxu0 0.0
        %433 = vmatpush1.xpose.msra.mxu0 0.0
        %434 = vmatprep.subr.mxu0 0.0
        %435 = vmatpush1.xpose.msra.mxu0 0.0
        %436 = vmatprep.subr.mxu0 0.0
        %437 = vmatpush1.xpose.msra.mxu0 0.0
        %438 = vmatprep.subr.mxu0 0.0
        %439 = vmatpush1.xpose.msra.mxu0 %v406
        %440 = vmatprep.subr.mxu0 0.0
        %441 = vmatpush2.xpose.msra.mxu0 0.0
        %442 = vmatprep.subr.mxu0 0.0
        %443 = vmatpush2.xpose.msra.mxu0 0.0
        %444 = vmatprep.subr.mxu0 0.0
        %445 = vmatpush2.xpose.msra.mxu0 0.0
        %446 = vmatprep.subr.mxu0 0.0
        %447 = vmatpush2.xpose.msra.mxu0 0.0
        %448 = vmatprep.subr.mxu0 0.0
        %449 = vmatpush2.xpose.msra.mxu0 0.0
        %450 = vmatprep.subr.mxu0 0.0
        %451 = vmatpush2.xpose.msra.mxu0 0.0
        %452 = vmatprep.subr.mxu0 0.0
        %453 = vmatpush2.xpose.msra.mxu0 0.0
        %454 = vmatprep.subr.mxu0 0.0
        %455 = vmatpush2.xpose.msra.mxu0 0.0
        %456 = vmatprep.subr.mxu0 0.0
        %457 = vmatpush2.xpose.msra.mxu0 0.0
        %458 = vmatprep.subr.mxu0 0.0
        %459 = vmatpush2.xpose.msra.mxu0 0.0
        %460 = vmatprep.subr.mxu0 0.0
        %461 = vmatpush2.xpose.msra.mxu0 0.0
        %462 = vmatprep.subr.mxu0 0.0
        %463 = vmatpush2.xpose.msra.mxu0 0.0
        %464 = vmatprep.subr.mxu0 0.0
        %465 = vmatpush2.xpose.msra.mxu0 0.0
        %466 = vmatprep.subr.mxu0 0.0
        %467 = vmatpush2.xpose.msra.mxu0 0.0
        %468 = vmatprep.subr.mxu0 0.0
        %469 = vmatpush2.xpose.msra.mxu0 0.0
        %470 = vmatprep.subr.mxu0 0.0
        %471 = vmatpush2.xpose.msra.mxu0 0.0
        %472 = vmatprep.mubr.f32.mxu0 0.0
        %473 = vmatmul.mubr.f32.gmra.mxu0 %v404
        %v474 = vpop.f32.mrf.mxu0
        %v475 = vadd.f32 0.0, %v474
        %v476 = vpop.f32.mrf.mxu0
        %477 = vdwg.mxu0
        %v478 = vsel %vm403, %v353, 0
        %v480 = vsel %vm403, %v368, 0
        %482 = vmatprep.subr.mxu0 0.0
        %483 = vmatpush1.xpose.msra.mxu0 0.0
        %484 = vmatprep.subr.mxu0 0.0
        %485 = vmatpush1.xpose.msra.mxu0 0.0
        %486 = vmatprep.subr.mxu0 0.0
        %487 = vmatpush1.xpose.msra.mxu0 0.0
        %488 = vmatprep.subr.mxu0 0.0
        %489 = vmatpush1.xpose.msra.mxu0 0.0
        %490 = vmatprep.subr.mxu0 0.0
        %491 = vmatpush1.xpose.msra.mxu0 0.0
        %492 = vmatprep.subr.mxu0 0.0
        %493 = vmatpush1.xpose.msra.mxu0 0.0
        %494 = vmatprep.subr.mxu0 0.0
        %495 = vmatpush1.xpose.msra.mxu0 0.0
        %496 = vmatprep.subr.mxu0 0.0
        %497 = vmatpush1.xpose.msra.mxu0 0.0
        %498 = vmatprep.subr.mxu0 0.0
        %499 = vmatpush1.xpose.msra.mxu0 0.0
        %500 = vmatprep.subr.mxu0 0.0
        %501 = vmatpush1.xpose.msra.mxu0 0.0
        %502 = vmatprep.subr.mxu0 0.0
        %503 = vmatpush1.xpose.msra.mxu0 0.0
        %504 = vmatprep.subr.mxu0 0.0
        %505 = vmatpush1.xpose.msra.mxu0 0.0
        %506 = vmatprep.subr.mxu0 0.0
        %507 = vmatpush1.xpose.msra.mxu0 0.0
        %508 = vmatprep.subr.mxu0 0.0
        %509 = vmatpush1.xpose.msra.mxu0 0.0
        %510 = vmatprep.subr.mxu0 0.0
        %511 = vmatpush1.xpose.msra.mxu0 0.0
        %512 = vmatprep.subr.mxu0 0.0
        %513 = vmatpush1.xpose.msra.mxu0 %v480
        %514 = vmatprep.subr.mxu0 0.0
        %515 = vmatpush2.xpose.msra.mxu0 0.0
        %516 = vmatprep.subr.mxu0 0.0
        %517 = vmatpush2.xpose.msra.mxu0 0.0
        %518 = vmatprep.subr.mxu0 0.0
        %519 = vmatpush2.xpose.msra.mxu0 0.0
        %520 = vmatprep.subr.mxu0 0.0
        %521 = vmatpush2.xpose.msra.mxu0 0.0
        %522 = vmatprep.subr.mxu0 0.0
        %523 = vmatpush2.xpose.msra.mxu0 0.0
        %524 = vmatprep.subr.mxu0 0.0
        %525 = vmatpush2.xpose.msra.mxu0 0.0
        %526 = vmatprep.subr.mxu0 0.0
        %527 = vmatpush2.xpose.msra.mxu0 0.0
        %528 = vmatprep.subr.mxu0 0.0
        %529 = vmatpush2.xpose.msra.mxu0 0.0
        %530 = vmatprep.subr.mxu0 0.0
        %531 = vmatpush2.xpose.msra.mxu0 0.0
        %532 = vmatprep.subr.mxu0 0.0
        %533 = vmatpush2.xpose.msra.mxu0 0.0
        %534 = vmatprep.subr.mxu0 0.0
        %535 = vmatpush2.xpose.msra.mxu0 0.0
        %536 = vmatprep.subr.mxu0 0.0
        %537 = vmatpush2.xpose.msra.mxu0 0.0
        %538 = vmatprep.subr.mxu0 0.0
        %539 = vmatpush2.xpose.msra.mxu0 0.0
        %540 = vmatprep.subr.mxu0 0.0
        %541 = vmatpush2.xpose.msra.mxu0 0.0
        %542 = vmatprep.subr.mxu0 0.0
        %543 = vmatpush2.xpose.msra.mxu0 0.0
        %544 = vmatprep.subr.mxu0 0.0
        %545 = vmatpush2.xpose.msra.mxu0 0.0
        %546 = vmatprep.mubr.f32.mxu0 0.0
        %547 = vmatmul.mubr.f32.gmra.mxu0 %v478
        %v548 = vpop.f32.mrf.mxu0
        %v549 = vadd.f32 0.0, %v548
        %v550 = vpop.f32.mrf.mxu0
        %551 = vdwg.mxu0
        %v552 = vsel %vm403, %v355, 0
        %v554 = vsel %vm403, %v370, 0
        %556 = vmatprep.subr.mxu0 0.0
        %557 = vmatpush1.xpose.msra.mxu0 0.0
        %558 = vmatprep.subr.mxu0 0.0
        %559 = vmatpush1.xpose.msra.mxu0 0.0
        %560 = vmatprep.subr.mxu0 0.0
        %561 = vmatpush1.xpose.msra.mxu0 0.0
        %562 = vmatprep.subr.mxu0 0.0
        %563 = vmatpush1.xpose.msra.mxu0 0.0
        %564 = vmatprep.subr.mxu0 0.0
        %565 = vmatpush1.xpose.msra.mxu0 0.0
        %566 = vmatprep.subr.mxu0 0.0
        %567 = vmatpush1.xpose.msra.mxu0 0.0
        %568 = vmatprep.subr.mxu0 0.0
        %569 = vmatpush1.xpose.msra.mxu0 0.0
        %570 = vmatprep.subr.mxu0 0.0
        %571 = vmatpush1.xpose.msra.mxu0 0.0
        %572 = vmatprep.subr.mxu0 0.0
        %573 = vmatpush1.xpose.msra.mxu0 0.0
        %574 = vmatprep.subr.mxu0 0.0
        %575 = vmatpush1.xpose.msra.mxu0 0.0
        %576 = vmatprep.subr.mxu0 0.0
        %577 = vmatpush1.xpose.msra.mxu0 0.0
        %578 = vmatprep.subr.mxu0 0.0
        %579 = vmatpush1.xpose.msra.mxu0 0.0
        %580 = vmatprep.subr.mxu0 0.0
        %581 = vmatpush1.xpose.msra.mxu0 0.0
        %582 = vmatprep.subr.mxu0 0.0
        %583 = vmatpush1.xpose.msra.mxu0 0.0
        %584 = vmatprep.subr.mxu0 0.0
        %585 = vmatpush1.xpose.msra.mxu0 0.0
        %586 = vmatprep.subr.mxu0 0.0
        %587 = vmatpush1.xpose.msra.mxu0 %v554
        %588 = vmatprep.subr.mxu0 0.0
        %589 = vmatpush2.xpose.msra.mxu0 0.0
        %590 = vmatprep.subr.mxu0 0.0
        %591 = vmatpush2.xpose.msra.mxu0 0.0
        %592 = vmatprep.subr.mxu0 0.0
        %593 = vmatpush2.xpose.msra.mxu0 0.0
        %594 = vmatprep.subr.mxu0 0.0
        %595 = vmatpush2.xpose.msra.mxu0 0.0
        %596 = vmatprep.subr.mxu0 0.0
        %597 = vmatpush2.xpose.msra.mxu0 0.0
        %598 = vmatprep.subr.mxu0 0.0
        %599 = vmatpush2.xpose.msra.mxu0 0.0
        %600 = vmatprep.subr.mxu0 0.0
        %601 = vmatpush2.xpose.msra.mxu0 0.0
        %602 = vmatprep.subr.mxu0 0.0
        %603 = vmatpush2.xpose.msra.mxu0 0.0
        %604 = vmatprep.subr.mxu0 0.0
        %605 = vmatpush2.xpose.msra.mxu0 0.0
        %606 = vmatprep.subr.mxu0 0.0
        %607 = vmatpush2.xpose.msra.mxu0 0.0
        %608 = vmatprep.subr.mxu0 0.0
        %609 = vmatpush2.xpose.msra.mxu0 0.0
        %610 = vmatprep.subr.mxu0 0.0
        %611 = vmatpush2.xpose.msra.mxu0 0.0
        %612 = vmatprep.subr.mxu0 0.0
        %613 = vmatpush2.xpose.msra.mxu0 0.0
        %614 = vmatprep.subr.mxu0 0.0
        %615 = vmatpush2.xpose.msra.mxu0 0.0
        %616 = vmatprep.subr.mxu0 0.0
        %617 = vmatpush2.xpose.msra.mxu0 0.0
        %618 = vmatprep.subr.mxu0 0.0
        %619 = vmatpush2.xpose.msra.mxu0 0.0
        %620 = vmatprep.mubr.f32.mxu0 0.0
        %621 = vmatmul.mubr.f32.gmra.mxu0 %v552
        %v622 = vpop.f32.mrf.mxu0
        %v623 = vadd.f32 0.0, %v622
        %v624 = vpop.f32.mrf.mxu0
        %625 = vdwg.mxu0
        %v626 = vsel %vm403, %v357, 0
        %v628 = vsel %vm403, %v372, 0
        %630 = vmatprep.subr.mxu0 0.0
        %631 = vmatpush1.xpose.msra.mxu0 0.0
        %632 = vmatprep.subr.mxu0 0.0
        %633 = vmatpush1.xpose.msra.mxu0 0.0
        %634 = vmatprep.subr.mxu0 0.0
        %635 = vmatpush1.xpose.msra.mxu0 0.0
        %636 = vmatprep.subr.mxu0 0.0
        %637 = vmatpush1.xpose.msra.mxu0 0.0
        %638 = vmatprep.subr.mxu0 0.0
        %639 = vmatpush1.xpose.msra.mxu0 0.0
        %640 = vmatprep.subr.mxu0 0.0
        %641 = vmatpush1.xpose.msra.mxu0 0.0
        %642 = vmatprep.subr.mxu0 0.0
        %643 = vmatpush1.xpose.msra.mxu0 0.0
        %644 = vmatprep.subr.mxu0 0.0
        %645 = vmatpush1.xpose.msra.mxu0 0.0
        %646 = vmatprep.subr.mxu0 0.0
        %647 = vmatpush1.xpose.msra.mxu0 0.0
        %648 = vmatprep.subr.mxu0 0.0
        %649 = vmatpush1.xpose.msra.mxu0 0.0
        %650 = vmatprep.subr.mxu0 0.0
        %651 = vmatpush1.xpose.msra.mxu0 0.0
        %652 = vmatprep.subr.mxu0 0.0
        %653 = vmatpush1.xpose.msra.mxu0 0.0
        %654 = vmatprep.subr.mxu0 0.0
        %655 = vmatpush1.xpose.msra.mxu0 0.0
        %656 = vmatprep.subr.mxu0 0.0
        %657 = vmatpush1.xpose.msra.mxu0 0.0
        %658 = vmatprep.subr.mxu0 0.0
        %659 = vmatpush1.xpose.msra.mxu0 0.0
        %660 = vmatprep.subr.mxu0 0.0
        %661 = vmatpush1.xpose.msra.mxu0 %v628
        %662 = vmatprep.subr.mxu0 0.0
        %663 = vmatpush2.xpose.msra.mxu0 0.0
        %664 = vmatprep.subr.mxu0 0.0
        %665 = vmatpush2.xpose.msra.mxu0 0.0
        %666 = vmatprep.subr.mxu0 0.0
        %667 = vmatpush2.xpose.msra.mxu0 0.0
        %668 = vmatprep.subr.mxu0 0.0
        %669 = vmatpush2.xpose.msra.mxu0 0.0
        %670 = vmatprep.subr.mxu0 0.0
        %671 = vmatpush2.xpose.msra.mxu0 0.0
        %672 = vmatprep.subr.mxu0 0.0
        %673 = vmatpush2.xpose.msra.mxu0 0.0
        %674 = vmatprep.subr.mxu0 0.0
        %675 = vmatpush2.xpose.msra.mxu0 0.0
        %676 = vmatprep.subr.mxu0 0.0
        %677 = vmatpush2.xpose.msra.mxu0 0.0
        %678 = vmatprep.subr.mxu0 0.0
        %679 = vmatpush2.xpose.msra.mxu0 0.0
        %680 = vmatprep.subr.mxu0 0.0
        %681 = vmatpush2.xpose.msra.mxu0 0.0
        %682 = vmatprep.subr.mxu0 0.0
        %683 = vmatpush2.xpose.msra.mxu0 0.0
        %684 = vmatprep.subr.mxu0 0.0
        %685 = vmatpush2.xpose.msra.mxu0 0.0
        %686 = vmatprep.subr.mxu0 0.0
        %687 = vmatpush2.xpose.msra.mxu0 0.0
        %688 = vmatprep.subr.mxu0 0.0
        %689 = vmatpush2.xpose.msra.mxu0 0.0
        %690 = vmatprep.subr.mxu0 0.0
        %691 = vmatpush2.xpose.msra.mxu0 0.0
        %692 = vmatprep.subr.mxu0 0.0
        %693 = vmatpush2.xpose.msra.mxu0 0.0
        %694 = vmatprep.mubr.f32.mxu0 0.0
        %695 = vmatmul.mubr.f32.gmra.mxu0 %v626
        %v696 = vpop.f32.mrf.mxu0
        %v697 = vadd.f32 0.0, %v696
        %v698 = vpop.f32.mrf.mxu0
        %699 = vdwg.mxu0
        %v700 = vsel %vm403, %v359, 0
        %v702 = vsel %vm403, %v374, 0
        %704 = vmatprep.subr.mxu0 0.0
        %705 = vmatpush1.xpose.msra.mxu0 0.0
        %706 = vmatprep.subr.mxu0 0.0
        %707 = vmatpush1.xpose.msra.mxu0 0.0
        %708 = vmatprep.subr.mxu0 0.0
        %709 = vmatpush1.xpose.msra.mxu0 0.0
        %710 = vmatprep.subr.mxu0 0.0
        %711 = vmatpush1.xpose.msra.mxu0 0.0
        %712 = vmatprep.subr.mxu0 0.0
        %713 = vmatpush1.xpose.msra.mxu0 0.0
        %714 = vmatprep.subr.mxu0 0.0
        %715 = vmatpush1.xpose.msra.mxu0 0.0
        %716 = vmatprep.subr.mxu0 0.0
        %717 = vmatpush1.xpose.msra.mxu0 0.0
        %718 = vmatprep.subr.mxu0 0.0
        %719 = vmatpush1.xpose.msra.mxu0 0.0
        %720 = vmatprep.subr.mxu0 0.0
        %721 = vmatpush1.xpose.msra.mxu0 0.0
        %722 = vmatprep.subr.mxu0 0.0
        %723 = vmatpush1.xpose.msra.mxu0 0.0
        %724 = vmatprep.subr.mxu0 0.0
        %725 = vmatpush1.xpose.msra.mxu0 0.0
        %726 = vmatprep.subr.mxu0 0.0
        %727 = vmatpush1.xpose.msra.mxu0 0.0
        %728 = vmatprep.subr.mxu0 0.0
        %729 = vmatpush1.xpose.msra.mxu0 0.0
        %730 = vmatprep.subr.mxu0 0.0
        %731 = vmatpush1.xpose.msra.mxu0 0.0
        %732 = vmatprep.subr.mxu0 0.0
        %733 = vmatpush1.xpose.msra.mxu0 0.0
        %734 = vmatprep.subr.mxu0 0.0
        %735 = vmatpush1.xpose.msra.mxu0 %v702
        %736 = vmatprep.subr.mxu0 0.0
        %737 = vmatpush2.xpose.msra.mxu0 0.0
        %738 = vmatprep.subr.mxu0 0.0
        %739 = vmatpush2.xpose.msra.mxu0 0.0
        %740 = vmatprep.subr.mxu0 0.0
        %741 = vmatpush2.xpose.msra.mxu0 0.0
        %742 = vmatprep.subr.mxu0 0.0
        %743 = vmatpush2.xpose.msra.mxu0 0.0
        %744 = vmatprep.subr.mxu0 0.0
        %745 = vmatpush2.xpose.msra.mxu0 0.0
        %746 = vmatprep.subr.mxu0 0.0
        %747 = vmatpush2.xpose.msra.mxu0 0.0
        %748 = vmatprep.subr.mxu0 0.0
        %749 = vmatpush2.xpose.msra.mxu0 0.0
        %750 = vmatprep.subr.mxu0 0.0
        %751 = vmatpush2.xpose.msra.mxu0 0.0
        %752 = vmatprep.subr.mxu0 0.0
        %753 = vmatpush2.xpose.msra.mxu0 0.0
        %754 = vmatprep.subr.mxu0 0.0
        %755 = vmatpush2.xpose.msra.mxu0 0.0
        %756 = vmatprep.subr.mxu0 0.0
        %757 = vmatpush2.xpose.msra.mxu0 0.0
        %758 = vmatprep.subr.mxu0 0.0
        %759 = vmatpush2.xpose.msra.mxu0 0.0
        %760 = vmatprep.subr.mxu0 0.0
        %761 = vmatpush2.xpose.msra.mxu0 0.0
        %762 = vmatprep.subr.mxu0 0.0
        %763 = vmatpush2.xpose.msra.mxu0 0.0
        %764 = vmatprep.subr.mxu0 0.0
        %765 = vmatpush2.xpose.msra.mxu0 0.0
        %766 = vmatprep.subr.mxu0 0.0
        %767 = vmatpush2.xpose.msra.mxu0 0.0
        %768 = vmatprep.mubr.f32.mxu0 0.0
        %769 = vmatmul.mubr.f32.gmra.mxu0 %v700
        %v770 = vpop.f32.mrf.mxu0
        %v771 = vadd.f32 0.0, %v770
        %v772 = vpop.f32.mrf.mxu0
        %773 = vdwg.mxu0
        %v774 = vsel %vm403, %v361, 0
        %v776 = vsel %vm403, %v376, 0
        %778 = vmatprep.subr.mxu0 0.0
        %779 = vmatpush1.xpose.msra.mxu0 0.0
        %780 = vmatprep.subr.mxu0 0.0
        %781 = vmatpush1.xpose.msra.mxu0 0.0
        %782 = vmatprep.subr.mxu0 0.0
        %783 = vmatpush1.xpose.msra.mxu0 0.0
        %784 = vmatprep.subr.mxu0 0.0
        %785 = vmatpush1.xpose.msra.mxu0 0.0
        %786 = vmatprep.subr.mxu0 0.0
        %787 = vmatpush1.xpose.msra.mxu0 0.0
        %788 = vmatprep.subr.mxu0 0.0
        %789 = vmatpush1.xpose.msra.mxu0 0.0
        %790 = vmatprep.subr.mxu0 0.0
        %791 = vmatpush1.xpose.msra.mxu0 0.0
        %792 = vmatprep.subr.mxu0 0.0
        %793 = vmatpush1.xpose.msra.mxu0 0.0
        %794 = vmatprep.subr.mxu0 0.0
        %795 = vmatpush1.xpose.msra.mxu0 0.0
        %796 = vmatprep.subr.mxu0 0.0
        %797 = vmatpush1.xpose.msra.mxu0 0.0
        %798 = vmatprep.subr.mxu0 0.0
        %799 = vmatpush1.xpose.msra.mxu0 0.0
        %800 = vmatprep.subr.mxu0 0.0
        %801 = vmatpush1.xpose.msra.mxu0 0.0
        %802 = vmatprep.subr.mxu0 0.0
        %803 = vmatpush1.xpose.msra.mxu0 0.0
        %804 = vmatprep.subr.mxu0 0.0
        %805 = vmatpush1.xpose.msra.mxu0 0.0
        %806 = vmatprep.subr.mxu0 0.0
        %807 = vmatpush1.xpose.msra.mxu0 0.0
        %808 = vmatprep.subr.mxu0 0.0
        %809 = vmatpush1.xpose.msra.mxu0 %v776
        %810 = vmatprep.subr.mxu0 0.0
        %811 = vmatpush2.xpose.msra.mxu0 0.0
        %812 = vmatprep.subr.mxu0 0.0
        %813 = vmatpush2.xpose.msra.mxu0 0.0
        %814 = vmatprep.subr.mxu0 0.0
        %815 = vmatpush2.xpose.msra.mxu0 0.0
        %816 = vmatprep.subr.mxu0 0.0
        %817 = vmatpush2.xpose.msra.mxu0 0.0
        %818 = vmatprep.subr.mxu0 0.0
        %819 = vmatpush2.xpose.msra.mxu0 0.0
        %820 = vmatprep.subr.mxu0 0.0
        %821 = vmatpush2.xpose.msra.mxu0 0.0
        %822 = vmatprep.subr.mxu0 0.0
        %823 = vmatpush2.xpose.msra.mxu0 0.0
        %824 = vmatprep.subr.mxu0 0.0
        %825 = vmatpush2.xpose.msra.mxu0 0.0
        %826 = vmatprep.subr.mxu0 0.0
        %827 = vmatpush2.xpose.msra.mxu0 0.0
        %828 = vmatprep.subr.mxu0 0.0
        %829 = vmatpush2.xpose.msra.mxu0 0.0
        %830 = vmatprep.subr.mxu0 0.0
        %831 = vmatpush2.xpose.msra.mxu0 0.0
        %832 = vmatprep.subr.mxu0 0.0
        %833 = vmatpush2.xpose.msra.mxu0 0.0
        %834 = vmatprep.subr.mxu0 0.0
        %835 = vmatpush2.xpose.msra.mxu0 0.0
        %836 = vmatprep.subr.mxu0 0.0
        %837 = vmatpush2.xpose.msra.mxu0 0.0
        %838 = vmatprep.subr.mxu0 0.0
        %839 = vmatpush2.xpose.msra.mxu0 0.0
        %840 = vmatprep.subr.mxu0 0.0
        %841 = vmatpush2.xpose.msra.mxu0 0.0
        %842 = vmatprep.mubr.f32.mxu0 0.0
        %843 = vmatmul.mubr.f32.gmra.mxu0 %v774
        %v844 = vpop.f32.mrf.mxu0
        %v845 = vadd.f32 0.0, %v844
        %v846 = vpop.f32.mrf.mxu0
        %847 = vdwg.mxu0
        %v848 = vsel %vm403, %v363, 0
        %v850 = vsel %vm403, %v378, 0
        %852 = vmatprep.subr.mxu0 0.0
        %853 = vmatpush1.xpose.msra.mxu0 0.0
        %854 = vmatprep.subr.mxu0 0.0
        %855 = vmatpush1.xpose.msra.mxu0 0.0
        %856 = vmatprep.subr.mxu0 0.0
        %857 = vmatpush1.xpose.msra.mxu0 0.0
        %858 = vmatprep.subr.mxu0 0.0
        %859 = vmatpush1.xpose.msra.mxu0 0.0
        %860 = vmatprep.subr.mxu0 0.0
        %861 = vmatpush1.xpose.msra.mxu0 0.0
        %862 = vmatprep.subr.mxu0 0.0
        %863 = vmatpush1.xpose.msra.mxu0 0.0
        %864 = vmatprep.subr.mxu0 0.0
        %865 = vmatpush1.xpose.msra.mxu0 0.0
        %866 = vmatprep.subr.mxu0 0.0
        %867 = vmatpush1.xpose.msra.mxu0 0.0
        %868 = vmatprep.subr.mxu0 0.0
        %869 = vmatpush1.xpose.msra.mxu0 0.0
        %870 = vmatprep.subr.mxu0 0.0
        %871 = vmatpush1.xpose.msra.mxu0 0.0
        %872 = vmatprep.subr.mxu0 0.0
        %873 = vmatpush1.xpose.msra.mxu0 0.0
        %874 = vmatprep.subr.mxu0 0.0
        %875 = vmatpush1.xpose.msra.mxu0 0.0
        %876 = vmatprep.subr.mxu0 0.0
        %877 = vmatpush1.xpose.msra.mxu0 0.0
        %878 = vmatprep.subr.mxu0 0.0
        %879 = vmatpush1.xpose.msra.mxu0 0.0
        %880 = vmatprep.subr.mxu0 0.0
        %881 = vmatpush1.xpose.msra.mxu0 0.0
        %882 = vmatprep.subr.mxu0 0.0
        %883 = vmatpush1.xpose.msra.mxu0 %v850
        %884 = vmatprep.subr.mxu0 0.0
        %885 = vmatpush2.xpose.msra.mxu0 0.0
        %886 = vmatprep.subr.mxu0 0.0
        %887 = vmatpush2.xpose.msra.mxu0 0.0
        %888 = vmatprep.subr.mxu0 0.0
        %889 = vmatpush2.xpose.msra.mxu0 0.0
        %890 = vmatprep.subr.mxu0 0.0
        %891 = vmatpush2.xpose.msra.mxu0 0.0
        %892 = vmatprep.subr.mxu0 0.0
        %893 = vmatpush2.xpose.msra.mxu0 0.0
        %894 = vmatprep.subr.mxu0 0.0
        %895 = vmatpush2.xpose.msra.mxu0 0.0
        %896 = vmatprep.subr.mxu0 0.0
        %897 = vmatpush2.xpose.msra.mxu0 0.0
        %898 = vmatprep.subr.mxu0 0.0
        %899 = vmatpush2.xpose.msra.mxu0 0.0
        %900 = vmatprep.subr.mxu0 0.0
        %901 = vmatpush2.xpose.msra.mxu0 0.0
        %902 = vmatprep.subr.mxu0 0.0
        %903 = vmatpush2.xpose.msra.mxu0 0.0
        %904 = vmatprep.subr.mxu0 0.0
        %905 = vmatpush2.xpose.msra.mxu0 0.0
        %906 = vmatprep.subr.mxu0 0.0
        %907 = vmatpush2.xpose.msra.mxu0 0.0
        %908 = vmatprep.subr.mxu0 0.0
        %909 = vmatpush2.xpose.msra.mxu0 0.0
        %910 = vmatprep.subr.mxu0 0.0
        %911 = vmatpush2.xpose.msra.mxu0 0.0
        %912 = vmatprep.subr.mxu0 0.0
        %913 = vmatpush2.xpose.msra.mxu0 0.0
        %914 = vmatprep.subr.mxu0 0.0
        %915 = vmatpush2.xpose.msra.mxu0 0.0
        %916 = vmatprep.mubr.f32.mxu0 0.0
        %917 = vmatmul.mubr.f32.gmra.mxu0 %v848
        %v918 = vpop.f32.mrf.mxu0
        %v919 = vadd.f32 0.0, %v918
        %v920 = vpop.f32.mrf.mxu0
        %921 = vdwg.mxu0
        %v922 = vsel %vm403, %v365, 0
        %v924 = vsel %vm403, %v380, 0
        %926 = vmatprep.subr.mxu0 0.0
        %927 = vmatpush1.xpose.msra.mxu0 0.0
        %928 = vmatprep.subr.mxu0 0.0
        %929 = vmatpush1.xpose.msra.mxu0 0.0
        %930 = vmatprep.subr.mxu0 0.0
        %931 = vmatpush1.xpose.msra.mxu0 0.0
        %932 = vmatprep.subr.mxu0 0.0
        %933 = vmatpush1.xpose.msra.mxu0 0.0
        %934 = vmatprep.subr.mxu0 0.0
        %935 = vmatpush1.xpose.msra.mxu0 0.0
        %936 = vmatprep.subr.mxu0 0.0
        %937 = vmatpush1.xpose.msra.mxu0 0.0
        %938 = vmatprep.subr.mxu0 0.0
        %939 = vmatpush1.xpose.msra.mxu0 0.0
        %940 = vmatprep.subr.mxu0 0.0
        %941 = vmatpush1.xpose.msra.mxu0 0.0
        %942 = vmatprep.subr.mxu0 0.0
        %943 = vmatpush1.xpose.msra.mxu0 0.0
        %944 = vmatprep.subr.mxu0 0.0
        %945 = vmatpush1.xpose.msra.mxu0 0.0
        %946 = vmatprep.subr.mxu0 0.0
        %947 = vmatpush1.xpose.msra.mxu0 0.0
        %948 = vmatprep.subr.mxu0 0.0
        %949 = vmatpush1.xpose.msra.mxu0 0.0
        %950 = vmatprep.subr.mxu0 0.0
        %951 = vmatpush1.xpose.msra.mxu0 0.0
        %952 = vmatprep.subr.mxu0 0.0
        %953 = vmatpush1.xpose.msra.mxu0 0.0
        %954 = vmatprep.subr.mxu0 0.0
        %955 = vmatpush1.xpose.msra.mxu0 0.0
        %956 = vmatprep.subr.mxu0 0.0
        %957 = vmatpush1.xpose.msra.mxu0 %v924
        %958 = vmatprep.subr.mxu0 0.0
        %959 = vmatpush2.xpose.msra.mxu0 0.0
        %960 = vmatprep.subr.mxu0 0.0
        %961 = vmatpush2.xpose.msra.mxu0 0.0
        %962 = vmatprep.subr.mxu0 0.0
        %963 = vmatpush2.xpose.msra.mxu0 0.0
        %964 = vmatprep.subr.mxu0 0.0
        %965 = vmatpush2.xpose.msra.mxu0 0.0
        %966 = vmatprep.subr.mxu0 0.0
        %967 = vmatpush2.xpose.msra.mxu0 0.0
        %968 = vmatprep.subr.mxu0 0.0
        %969 = vmatpush2.xpose.msra.mxu0 0.0
        %970 = vmatprep.subr.mxu0 0.0
        %971 = vmatpush2.xpose.msra.mxu0 0.0
        %972 = vmatprep.subr.mxu0 0.0
        %973 = vmatpush2.xpose.msra.mxu0 0.0
        %974 = vmatprep.subr.mxu0 0.0
        %975 = vmatpush2.xpose.msra.mxu0 0.0
        %976 = vmatprep.subr.mxu0 0.0
        %977 = vmatpush2.xpose.msra.mxu0 0.0
        %978 = vmatprep.subr.mxu0 0.0
        %979 = vmatpush2.xpose.msra.mxu0 0.0
        %980 = vmatprep.subr.mxu0 0.0
        %981 = vmatpush2.xpose.msra.mxu0 0.0
        %982 = vmatprep.subr.mxu0 0.0
        %983 = vmatpush2.xpose.msra.mxu0 0.0
        %984 = vmatprep.subr.mxu0 0.0
        %985 = vmatpush2.xpose.msra.mxu0 0.0
        %986 = vmatprep.subr.mxu0 0.0
        %987 = vmatpush2.xpose.msra.mxu0 0.0
        %988 = vmatprep.subr.mxu0 0.0
        %989 = vmatpush2.xpose.msra.mxu0 0.0
        %990 = vmatprep.mubr.f32.mxu0 0.0
        %991 = vmatmul.mubr.f32.gmra.mxu0 %v922
        %v992 = vpop.f32.mrf.mxu0
        %v993 = vadd.f32 0.0, %v992
        %v994 = vpop.f32.mrf.mxu0
        %995 = vdwg.mxu0
        %vm996 = vcmask 64512
        %v997 = vsel %vm996, %v475, -inf
        %998 = vmax.xlane.f32.xlu0 %v997
        %v999 = vpop.xlane.xlu0 %998
        %v1000 = vsel %vm996, %v549, -inf
        %1001 = vmax.xlane.f32.xlu0 %v1000
        %v1002 = vpop.xlane.xlu0 %1001
        %v1003 = vsel %vm996, %v623, -inf
        %1004 = vmax.xlane.f32.xlu0 %v1003
        %v1005 = vpop.xlane.xlu0 %1004
        %v1006 = vsel %vm996, %v697, -inf
        %1007 = vmax.xlane.f32.xlu0 %v1006
        %v1008 = vpop.xlane.xlu0 %1007
        %v1009 = vsel %vm996, %v771, -inf
        %1010 = vmax.xlane.f32.xlu0 %v1009
        %v1011 = vpop.xlane.xlu0 %1010
        %v1012 = vsel %vm996, %v845, -inf
        %1013 = vmax.xlane.f32.xlu0 %v1012
        %v1014 = vpop.xlane.xlu0 %1013
        %v1015 = vsel %vm996, %v919, -inf
        %1016 = vmax.xlane.f32.xlu0 %v1015
        %v1017 = vpop.xlane.xlu0 %1016
        %v1018 = vsel %vm996, %v993, -inf
        %1019 = vmax.xlane.f32.xlu0 %v1018
        %v1020 = vpop.xlane.xlu0 %1019
        %v1021 = vsub.f32 %v475, %v999
        %v1022 = vsub.f32 %v549, %v1002
        %v1023 = vsub.f32 %v623, %v1005
        %v1024 = vsub.f32 %v697, %v1008
        %v1025 = vsub.f32 %v771, %v1011
        %v1026 = vsub.f32 %v845, %v1014
        %v1027 = vsub.f32 %v919, %v1017
        %v1028 = vsub.f32 %v993, %v1020
        %v1029 = vmul.f32 %v1021, 1.442695
        %v1030 = vpow.pop %v1029
        %v1031 = vmul.f32 %v1022, 1.442695
        %v1032 = vpow.pop %v1031
        %v1033 = vmul.f32 %v1023, 1.442695
        %v1034 = vpow.pop %v1033
        %v1035 = vmul.f32 %v1024, 1.442695
        %v1036 = vpow.pop %v1035
        %v1037 = vmul.f32 %v1025, 1.442695
        %v1038 = vpow.pop %v1037
        %v1039 = vmul.f32 %v1026, 1.442695
        %v1040 = vpow.pop %v1039
        %v1041 = vmul.f32 %v1027, 1.442695
        %v1042 = vpow.pop %v1041
        %v1043 = vmul.f32 %v1028, 1.442695
        %v1044 = vpow.pop %v1043
        %v1045 = vsel %vm996, %v1030, 0.0
        %1046 = vadd.xlane.f32.xlu0 %v1045
        %v1047 = vpop.xlane.xlu0 %1046
        %v1048 = vsel %vm996, %v1032, 0.0
        %1049 = vadd.xlane.f32.xlu0 %v1048
        %v1050 = vpop.xlane.xlu0 %1049
        %v1051 = vsel %vm996, %v1034, 0.0
        %1052 = vadd.xlane.f32.xlu0 %v1051
        %v1053 = vpop.xlane.xlu0 %1052
        %v1054 = vsel %vm996, %v1036, 0.0
        %1055 = vadd.xlane.f32.xlu0 %v1054
        %v1056 = vpop.xlane.xlu0 %1055
        %v1057 = vsel %vm996, %v1038, 0.0
        %1058 = vadd.xlane.f32.xlu0 %v1057
        %v1059 = vpop.xlane.xlu0 %1058
        %v1060 = vsel %vm996, %v1040, 0.0
        %1061 = vadd.xlane.f32.xlu0 %v1060
        %v1062 = vpop.xlane.xlu0 %1061
        %v1063 = vsel %vm996, %v1042, 0.0
        %1064 = vadd.xlane.f32.xlu0 %v1063
        %v1065 = vpop.xlane.xlu0 %1064
        %v1066 = vsel %vm996, %v1044, 0.0
        %1067 = vadd.xlane.f32.xlu0 %v1066
        %v1068 = vpop.xlane.xlu0 %1067
        %v1069 = vrcp.pop %v1047
        %v1070 = vrcp.pop %v1050
        %v1071 = vrcp.pop %v1053
        %v1072 = vrcp.pop %v1056
        %v1073 = vrcp.pop %v1059
        %v1074 = vrcp.pop %v1062
        %v1075 = vrcp.pop %v1065
        %v1076 = vrcp.pop %v1068
        %v1077 = vmul.f32 %v1030, %v1069
        %v1078 = vmul.f32 %v1032, %v1070
        %v1079 = vmul.f32 %v1034, %v1071
        %v1080 = vmul.f32 %v1036, %v1072
        %v1081 = vmul.f32 %v1038, %v1073
        %v1082 = vmul.f32 %v1040, %v1074
        %v1083 = vmul.f32 %v1042, %v1075
        %v1084 = vmul.f32 %v1044, %v1076
        %v1086 = vsel %vm996, %v1077, 0
        %1088 = vmatprep.subr.mxu0 0.0
        %1089 = vmatpush1.msra.mxu0 0.0
        %1090 = vmatprep.subr.mxu0 0.0
        %1091 = vmatpush1.msra.mxu0 0.0
        %1092 = vmatprep.subr.mxu0 0.0
        %1093 = vmatpush1.msra.mxu0 0.0
        %1094 = vmatprep.subr.mxu0 0.0
        %1095 = vmatpush1.msra.mxu0 0.0
        %1096 = vmatprep.subr.mxu0 0.0
        %1097 = vmatpush1.msra.mxu0 0.0
        %1098 = vmatprep.subr.mxu0 0.0
        %1099 = vmatpush1.msra.mxu0 0.0
        %1100 = vmatprep.subr.mxu0 0.0
        %1101 = vmatpush1.msra.mxu0 0.0
        %1102 = vmatprep.subr.mxu0 0.0
        %1103 = vmatpush1.msra.mxu0 0.0
        %1104 = vmatprep.subr.mxu0 0.0
        %1105 = vmatpush1.msra.mxu0 0.0
        %1106 = vmatprep.subr.mxu0 0.0
        %1107 = vmatpush1.msra.mxu0 0.0
        %1108 = vmatprep.subr.mxu0 0.0
        %1109 = vmatpush1.msra.mxu0 0.0
        %1110 = vmatprep.subr.mxu0 0.0
        %1111 = vmatpush1.msra.mxu0 0.0
        %1112 = vmatprep.subr.mxu0 0.0
        %1113 = vmatpush1.msra.mxu0 0.0
        %1114 = vmatprep.subr.mxu0 0.0
        %1115 = vmatpush1.msra.mxu0 0.0
        %1116 = vmatprep.subr.mxu0 0.0
        %1117 = vmatpush1.msra.mxu0 0.0
        %1118 = vmatprep.subr.mxu0 0.0
        %1119 = vmatpush1.msra.mxu0 %v348
        %1120 = vmatprep.subr.mxu0 0.0
        %1121 = vmatpush2.msra.mxu0 0.0
        %1122 = vmatprep.subr.mxu0 0.0
        %1123 = vmatpush2.msra.mxu0 0.0
        %1124 = vmatprep.subr.mxu0 0.0
        %1125 = vmatpush2.msra.mxu0 0.0
        %1126 = vmatprep.subr.mxu0 0.0
        %1127 = vmatpush2.msra.mxu0 0.0
        %1128 = vmatprep.subr.mxu0 0.0
        %1129 = vmatpush2.msra.mxu0 0.0
        %1130 = vmatprep.subr.mxu0 0.0
        %1131 = vmatpush2.msra.mxu0 0.0
        %1132 = vmatprep.subr.mxu0 0.0
        %1133 = vmatpush2.msra.mxu0 0.0
        %1134 = vmatprep.subr.mxu0 0.0
        %1135 = vmatpush2.msra.mxu0 0.0
        %1136 = vmatprep.subr.mxu0 0.0
        %1137 = vmatpush2.msra.mxu0 0.0
        %1138 = vmatprep.subr.mxu0 0.0
        %1139 = vmatpush2.msra.mxu0 0.0
        %1140 = vmatprep.subr.mxu0 0.0
        %1141 = vmatpush2.msra.mxu0 0.0
        %1142 = vmatprep.subr.mxu0 0.0
        %1143 = vmatpush2.msra.mxu0 0.0
        %1144 = vmatprep.subr.mxu0 0.0
        %1145 = vmatpush2.msra.mxu0 0.0
        %1146 = vmatprep.subr.mxu0 0.0
        %1147 = vmatpush2.msra.mxu0 0.0
        %1148 = vmatprep.subr.mxu0 0.0
        %1149 = vmatpush2.msra.mxu0 0.0
        %1150 = vmatprep.subr.mxu0 0.0
        %1151 = vmatpush2.msra.mxu0 0.0
        %1152 = vmatprep.mubr.f32.mxu0 0.0
        %1153 = vmatmul.mubr.f32.gmra.mxu0 %v1086
        %v1154 = vpop.f32.mrf.mxu0
        %v1155 = vadd.f32 0.0, %v1154
        %v1156 = vpop.f32.mrf.mxu0
        %1157 = vdwg.mxu0
        %v1159 = vsel %vm996, %v1078, 0
        %1161 = vmatprep.subr.mxu0 0.0
        %1162 = vmatpush1.msra.mxu0 0.0
        %1163 = vmatprep.subr.mxu0 0.0
        %1164 = vmatpush1.msra.mxu0 0.0
        %1165 = vmatprep.subr.mxu0 0.0
        %1166 = vmatpush1.msra.mxu0 0.0
        %1167 = vmatprep.subr.mxu0 0.0
        %1168 = vmatpush1.msra.mxu0 0.0
        %1169 = vmatprep.subr.mxu0 0.0
        %1170 = vmatpush1.msra.mxu0 0.0
        %1171 = vmatprep.subr.mxu0 0.0
        %1172 = vmatpush1.msra.mxu0 0.0
        %1173 = vmatprep.subr.mxu0 0.0
        %1174 = vmatpush1.msra.mxu0 0.0
        %1175 = vmatprep.subr.mxu0 0.0
        %1176 = vmatpush1.msra.mxu0 0.0
        %1177 = vmatprep.subr.mxu0 0.0
        %1178 = vmatpush1.msra.mxu0 0.0
        %1179 = vmatprep.subr.mxu0 0.0
        %1180 = vmatpush1.msra.mxu0 0.0
        %1181 = vmatprep.subr.mxu0 0.0
        %1182 = vmatpush1.msra.mxu0 0.0
        %1183 = vmatprep.subr.mxu0 0.0
        %1184 = vmatpush1.msra.mxu0 0.0
        %1185 = vmatprep.subr.mxu0 0.0
        %1186 = vmatpush1.msra.mxu0 0.0
        %1187 = vmatprep.subr.mxu0 0.0
        %1188 = vmatpush1.msra.mxu0 0.0
        %1189 = vmatprep.subr.mxu0 0.0
        %1190 = vmatpush1.msra.mxu0 0.0
        %1191 = vmatprep.subr.mxu0 0.0
        %1192 = vmatpush1.msra.mxu0 %v383
        %1193 = vmatprep.subr.mxu0 0.0
        %1194 = vmatpush2.msra.mxu0 0.0
        %1195 = vmatprep.subr.mxu0 0.0
        %1196 = vmatpush2.msra.mxu0 0.0
        %1197 = vmatprep.subr.mxu0 0.0
        %1198 = vmatpush2.msra.mxu0 0.0
        %1199 = vmatprep.subr.mxu0 0.0
        %1200 = vmatpush2.msra.mxu0 0.0
        %1201 = vmatprep.subr.mxu0 0.0
        %1202 = vmatpush2.msra.mxu0 0.0
        %1203 = vmatprep.subr.mxu0 0.0
        %1204 = vmatpush2.msra.mxu0 0.0
        %1205 = vmatprep.subr.mxu0 0.0
        %1206 = vmatpush2.msra.mxu0 0.0
        %1207 = vmatprep.subr.mxu0 0.0
        %1208 = vmatpush2.msra.mxu0 0.0
        %1209 = vmatprep.subr.mxu0 0.0
        %1210 = vmatpush2.msra.mxu0 0.0
        %1211 = vmatprep.subr.mxu0 0.0
        %1212 = vmatpush2.msra.mxu0 0.0
        %1213 = vmatprep.subr.mxu0 0.0
        %1214 = vmatpush2.msra.mxu0 0.0
        %1215 = vmatprep.subr.mxu0 0.0
        %1216 = vmatpush2.msra.mxu0 0.0
        %1217 = vmatprep.subr.mxu0 0.0
        %1218 = vmatpush2.msra.mxu0 0.0
        %1219 = vmatprep.subr.mxu0 0.0
        %1220 = vmatpush2.msra.mxu0 0.0
        %1221 = vmatprep.subr.mxu0 0.0
        %1222 = vmatpush2.msra.mxu0 0.0
        %1223 = vmatprep.subr.mxu0 0.0
        %1224 = vmatpush2.msra.mxu0 0.0
        %1225 = vmatprep.mubr.f32.mxu0 0.0
        %1226 = vmatmul.mubr.f32.gmra.mxu0 %v1159
        %v1227 = vpop.f32.mrf.mxu0
        %v1228 = vadd.f32 0.0, %v1227
        %v1229 = vpop.f32.mrf.mxu0
        %1230 = vdwg.mxu0
        %v1232 = vsel %vm996, %v1079, 0
        %1234 = vmatprep.subr.mxu0 0.0
        %1235 = vmatpush1.msra.mxu0 0.0
        %1236 = vmatprep.subr.mxu0 0.0
        %1237 = vmatpush1.msra.mxu0 0.0
        %1238 = vmatprep.subr.mxu0 0.0
        %1239 = vmatpush1.msra.mxu0 0.0
        %1240 = vmatprep.subr.mxu0 0.0
        %1241 = vmatpush1.msra.mxu0 0.0
        %1242 = vmatprep.subr.mxu0 0.0
        %1243 = vmatpush1.msra.mxu0 0.0
        %1244 = vmatprep.subr.mxu0 0.0
        %1245 = vmatpush1.msra.mxu0 0.0
        %1246 = vmatprep.subr.mxu0 0.0
        %1247 = vmatpush1.msra.mxu0 0.0
        %1248 = vmatprep.subr.mxu0 0.0
        %1249 = vmatpush1.msra.mxu0 0.0
        %1250 = vmatprep.subr.mxu0 0.0
        %1251 = vmatpush1.msra.mxu0 0.0
        %1252 = vmatprep.subr.mxu0 0.0
        %1253 = vmatpush1.msra.mxu0 0.0
        %1254 = vmatprep.subr.mxu0 0.0
        %1255 = vmatpush1.msra.mxu0 0.0
        %1256 = vmatprep.subr.mxu0 0.0
        %1257 = vmatpush1.msra.mxu0 0.0
        %1258 = vmatprep.subr.mxu0 0.0
        %1259 = vmatpush1.msra.mxu0 0.0
        %1260 = vmatprep.subr.mxu0 0.0
        %1261 = vmatpush1.msra.mxu0 0.0
        %1262 = vmatprep.subr.mxu0 0.0
        %1263 = vmatpush1.msra.mxu0 0.0
        %1264 = vmatprep.subr.mxu0 0.0
        %1265 = vmatpush1.msra.mxu0 %v386
        %1266 = vmatprep.subr.mxu0 0.0
        %1267 = vmatpush2.msra.mxu0 0.0
        %1268 = vmatprep.subr.mxu0 0.0
        %1269 = vmatpush2.msra.mxu0 0.0
        %1270 = vmatprep.subr.mxu0 0.0
        %1271 = vmatpush2.msra.mxu0 0.0
        %1272 = vmatprep.subr.mxu0 0.0
        %1273 = vmatpush2.msra.mxu0 0.0
        %1274 = vmatprep.subr.mxu0 0.0
        %1275 = vmatpush2.msra.mxu0 0.0
        %1276 = vmatprep.subr.mxu0 0.0
        %1277 = vmatpush2.msra.mxu0 0.0
        %1278 = vmatprep.subr.mxu0 0.0
        %1279 = vmatpush2.msra.mxu0 0.0
        %1280 = vmatprep.subr.mxu0 0.0
        %1281 = vmatpush2.msra.mxu0 0.0
        %1282 = vmatprep.subr.mxu0 0.0
        %1283 = vmatpush2.msra.mxu0 0.0
        %1284 = vmatprep.subr.mxu0 0.0
        %1285 = vmatpush2.msra.mxu0 0.0
        %1286 = vmatprep.subr.mxu0 0.0
        %1287 = vmatpush2.msra.mxu0 0.0
        %1288 = vmatprep.subr.mxu0 0.0
        %1289 = vmatpush2.msra.mxu0 0.0
        %1290 = vmatprep.subr.mxu0 0.0
        %1291 = vmatpush2.msra.mxu0 0.0
        %1292 = vmatprep.subr.mxu0 0.0
        %1293 = vmatpush2.msra.mxu0 0.0
        %1294 = vmatprep.subr.mxu0 0.0
        %1295 = vmatpush2.msra.mxu0 0.0
        %1296 = vmatprep.subr.mxu0 0.0
        %1297 = vmatpush2.msra.mxu0 0.0
        %1298 = vmatprep.mubr.f32.mxu0 0.0
        %1299 = vmatmul.mubr.f32.gmra.mxu0 %v1232
        %v1300 = vpop.f32.mrf.mxu0
        %v1301 = vadd.f32 0.0, %v1300
        %v1302 = vpop.f32.mrf.mxu0
        %1303 = vdwg.mxu0
        %v1305 = vsel %vm996, %v1080, 0
        %1307 = vmatprep.subr.mxu0 0.0
        %1308 = vmatpush1.msra.mxu0 0.0
        %1309 = vmatprep.subr.mxu0 0.0
        %1310 = vmatpush1.msra.mxu0 0.0
        %1311 = vmatprep.subr.mxu0 0.0
        %1312 = vmatpush1.msra.mxu0 0.0
        %1313 = vmatprep.subr.mxu0 0.0
        %1314 = vmatpush1.msra.mxu0 0.0
        %1315 = vmatprep.subr.mxu0 0.0
        %1316 = vmatpush1.msra.mxu0 0.0
        %1317 = vmatprep.subr.mxu0 0.0
        %1318 = vmatpush1.msra.mxu0 0.0
        %1319 = vmatprep.subr.mxu0 0.0
        %1320 = vmatpush1.msra.mxu0 0.0
        %1321 = vmatprep.subr.mxu0 0.0
        %1322 = vmatpush1.msra.mxu0 0.0
        %1323 = vmatprep.subr.mxu0 0.0
        %1324 = vmatpush1.msra.mxu0 0.0
        %1325 = vmatprep.subr.mxu0 0.0
        %1326 = vmatpush1.msra.mxu0 0.0
        %1327 = vmatprep.subr.mxu0 0.0
        %1328 = vmatpush1.msra.mxu0 0.0
        %1329 = vmatprep.subr.mxu0 0.0
        %1330 = vmatpush1.msra.mxu0 0.0
        %1331 = vmatprep.subr.mxu0 0.0
        %1332 = vmatpush1.msra.mxu0 0.0
        %1333 = vmatprep.subr.mxu0 0.0
        %1334 = vmatpush1.msra.mxu0 0.0
        %1335 = vmatprep.subr.mxu0 0.0
        %1336 = vmatpush1.msra.mxu0 0.0
        %1337 = vmatprep.subr.mxu0 0.0
        %1338 = vmatpush1.msra.mxu0 %v389
        %1339 = vmatprep.subr.mxu0 0.0
        %1340 = vmatpush2.msra.mxu0 0.0
        %1341 = vmatprep.subr.mxu0 0.0
        %1342 = vmatpush2.msra.mxu0 0.0
        %1343 = vmatprep.subr.mxu0 0.0
        %1344 = vmatpush2.msra.mxu0 0.0
        %1345 = vmatprep.subr.mxu0 0.0
        %1346 = vmatpush2.msra.mxu0 0.0
        %1347 = vmatprep.subr.mxu0 0.0
        %1348 = vmatpush2.msra.mxu0 0.0
        %1349 = vmatprep.subr.mxu0 0.0
        %1350 = vmatpush2.msra.mxu0 0.0
        %1351 = vmatprep.subr.mxu0 0.0
        %1352 = vmatpush2.msra.mxu0 0.0
        %1353 = vmatprep.subr.mxu0 0.0
        %1354 = vmatpush2.msra.mxu0 0.0
        %1355 = vmatprep.subr.mxu0 0.0
        %1356 = vmatpush2.msra.mxu0 0.0
        %1357 = vmatprep.subr.mxu0 0.0
        %1358 = vmatpush2.msra.mxu0 0.0
        %1359 = vmatprep.subr.mxu0 0.0
        %1360 = vmatpush2.msra.mxu0 0.0
        %1361 = vmatprep.subr.mxu0 0.0
        %1362 = vmatpush2.msra.mxu0 0.0
        %1363 = vmatprep.subr.mxu0 0.0
        %1364 = vmatpush2.msra.mxu0 0.0
        %1365 = vmatprep.subr.mxu0 0.0
        %1366 = vmatpush2.msra.mxu0 0.0
        %1367 = vmatprep.subr.mxu0 0.0
        %1368 = vmatpush2.msra.mxu0 0.0
        %1369 = vmatprep.subr.mxu0 0.0
        %1370 = vmatpush2.msra.mxu0 0.0
        %1371 = vmatprep.mubr.f32.mxu0 0.0
        %1372 = vmatmul.mubr.f32.gmra.mxu0 %v1305
        %v1373 = vpop.f32.mrf.mxu0
        %v1374 = vadd.f32 0.0, %v1373
        %v1375 = vpop.f32.mrf.mxu0
        %1376 = vdwg.mxu0
        %v1378 = vsel %vm996, %v1081, 0
        %1380 = vmatprep.subr.mxu0 0.0
        %1381 = vmatpush1.msra.mxu0 0.0
        %1382 = vmatprep.subr.mxu0 0.0
        %1383 = vmatpush1.msra.mxu0 0.0
        %1384 = vmatprep.subr.mxu0 0.0
        %1385 = vmatpush1.msra.mxu0 0.0
        %1386 = vmatprep.subr.mxu0 0.0
        %1387 = vmatpush1.msra.mxu0 0.0
        %1388 = vmatprep.subr.mxu0 0.0
        %1389 = vmatpush1.msra.mxu0 0.0
        %1390 = vmatprep.subr.mxu0 0.0
        %1391 = vmatpush1.msra.mxu0 0.0
        %1392 = vmatprep.subr.mxu0 0.0
        %1393 = vmatpush1.msra.mxu0 0.0
        %1394 = vmatprep.subr.mxu0 0.0
        %1395 = vmatpush1.msra.mxu0 0.0
        %1396 = vmatprep.subr.mxu0 0.0
        %1397 = vmatpush1.msra.mxu0 0.0
        %1398 = vmatprep.subr.mxu0 0.0
        %1399 = vmatpush1.msra.mxu0 0.0
        %1400 = vmatprep.subr.mxu0 0.0
        %1401 = vmatpush1.msra.mxu0 0.0
        %1402 = vmatprep.subr.mxu0 0.0
        %1403 = vmatpush1.msra.mxu0 0.0
        %1404 = vmatprep.subr.mxu0 0.0
        %1405 = vmatpush1.msra.mxu0 0.0
        %1406 = vmatprep.subr.mxu0 0.0
        %1407 = vmatpush1.msra.mxu0 0.0
        %1408 = vmatprep.subr.mxu0 0.0
        %1409 = vmatpush1.msra.mxu0 0.0
        %1410 = vmatprep.subr.mxu0 0.0
        %1411 = vmatpush1.msra.mxu0 %v392
        %1412 = vmatprep.subr.mxu0 0.0
        %1413 = vmatpush2.msra.mxu0 0.0
        %1414 = vmatprep.subr.mxu0 0.0
        %1415 = vmatpush2.msra.mxu0 0.0
        %1416 = vmatprep.subr.mxu0 0.0
        %1417 = vmatpush2.msra.mxu0 0.0
        %1418 = vmatprep.subr.mxu0 0.0
        %1419 = vmatpush2.msra.mxu0 0.0
        %1420 = vmatprep.subr.mxu0 0.0
        %1421 = vmatpush2.msra.mxu0 0.0
        %1422 = vmatprep.subr.mxu0 0.0
        %1423 = vmatpush2.msra.mxu0 0.0
        %1424 = vmatprep.subr.mxu0 0.0
        %1425 = vmatpush2.msra.mxu0 0.0
        %1426 = vmatprep.subr.mxu0 0.0
        %1427 = vmatpush2.msra.mxu0 0.0
        %1428 = vmatprep.subr.mxu0 0.0
        %1429 = vmatpush2.msra.mxu0 0.0
        %1430 = vmatprep.subr.mxu0 0.0
        %1431 = vmatpush2.msra.mxu0 0.0
        %1432 = vmatprep.subr.mxu0 0.0
        %1433 = vmatpush2.msra.mxu0 0.0
        %1434 = vmatprep.subr.mxu0 0.0
        %1435 = vmatpush2.msra.mxu0 0.0
        %1436 = vmatprep.subr.mxu0 0.0
        %1437 = vmatpush2.msra.mxu0 0.0
        %1438 = vmatprep.subr.mxu0 0.0
        %1439 = vmatpush2.msra.mxu0 0.0
        %1440 = vmatprep.subr.mxu0 0.0
        %1441 = vmatpush2.msra.mxu0 0.0
        %1442 = vmatprep.subr.mxu0 0.0
        %1443 = vmatpush2.msra.mxu0 0.0
        %1444 = vmatprep.mubr.f32.mxu0 0.0
        %1445 = vmatmul.mubr.f32.gmra.mxu0 %v1378
        %v1446 = vpop.f32.mrf.mxu0
        %v1447 = vadd.f32 0.0, %v1446
        %v1448 = vpop.f32.mrf.mxu0
        %1449 = vdwg.mxu0
        %v1451 = vsel %vm996, %v1082, 0
        %1453 = vmatprep.subr.mxu0 0.0
        %1454 = vmatpush1.msra.mxu0 0.0
        %1455 = vmatprep.subr.mxu0 0.0
        %1456 = vmatpush1.msra.mxu0 0.0
        %1457 = vmatprep.subr.mxu0 0.0
        %1458 = vmatpush1.msra.mxu0 0.0
        %1459 = vmatprep.subr.mxu0 0.0
        %1460 = vmatpush1.msra.mxu0 0.0
        %1461 = vmatprep.subr.mxu0 0.0
        %1462 = vmatpush1.msra.mxu0 0.0
        %1463 = vmatprep.subr.mxu0 0.0
        %1464 = vmatpush1.msra.mxu0 0.0
        %1465 = vmatprep.subr.mxu0 0.0
        %1466 = vmatpush1.msra.mxu0 0.0
        %1467 = vmatprep.subr.mxu0 0.0
        %1468 = vmatpush1.msra.mxu0 0.0
        %1469 = vmatprep.subr.mxu0 0.0
        %1470 = vmatpush1.msra.mxu0 0.0
        %1471 = vmatprep.subr.mxu0 0.0
        %1472 = vmatpush1.msra.mxu0 0.0
        %1473 = vmatprep.subr.mxu0 0.0
        %1474 = vmatpush1.msra.mxu0 0.0
        %1475 = vmatprep.subr.mxu0 0.0
        %1476 = vmatpush1.msra.mxu0 0.0
        %1477 = vmatprep.subr.mxu0 0.0
        %1478 = vmatpush1.msra.mxu0 0.0
        %1479 = vmatprep.subr.mxu0 0.0
        %1480 = vmatpush1.msra.mxu0 0.0
        %1481 = vmatprep.subr.mxu0 0.0
        %1482 = vmatpush1.msra.mxu0 0.0
        %1483 = vmatprep.subr.mxu0 0.0
        %1484 = vmatpush1.msra.mxu0 %v395
        %1485 = vmatprep.subr.mxu0 0.0
        %1486 = vmatpush2.msra.mxu0 0.0
        %1487 = vmatprep.subr.mxu0 0.0
        %1488 = vmatpush2.msra.mxu0 0.0
        %1489 = vmatprep.subr.mxu0 0.0
        %1490 = vmatpush2.msra.mxu0 0.0
        %1491 = vmatprep.subr.mxu0 0.0
        %1492 = vmatpush2.msra.mxu0 0.0
        %1493 = vmatprep.subr.mxu0 0.0
        %1494 = vmatpush2.msra.mxu0 0.0
        %1495 = vmatprep.subr.mxu0 0.0
        %1496 = vmatpush2.msra.mxu0 0.0
        %1497 = vmatprep.subr.mxu0 0.0
        %1498 = vmatpush2.msra.mxu0 0.0
        %1499 = vmatprep.subr.mxu0 0.0
        %1500 = vmatpush2.msra.mxu0 0.0
        %1501 = vmatprep.subr.mxu0 0.0
        %1502 = vmatpush2.msra.mxu0 0.0
        %1503 = vmatprep.subr.mxu0 0.0
        %1504 = vmatpush2.msra.mxu0 0.0
        %1505 = vmatprep.subr.mxu0 0.0
        %1506 = vmatpush2.msra.mxu0 0.0
        %1507 = vmatprep.subr.mxu0 0.0
        %1508 = vmatpush2.msra.mxu0 0.0
        %1509 = vmatprep.subr.mxu0 0.0
        %1510 = vmatpush2.msra.mxu0 0.0
        %1511 = vmatprep.subr.mxu0 0.0
        %1512 = vmatpush2.msra.mxu0 0.0
        %1513 = vmatprep.subr.mxu0 0.0
        %1514 = vmatpush2.msra.mxu0 0.0
        %1515 = vmatprep.subr.mxu0 0.0
        %1516 = vmatpush2.msra.mxu0 0.0
        %1517 = vmatprep.mubr.f32.mxu0 0.0
        %1518 = vmatmul.mubr.f32.gmra.mxu0 %v1451
        %v1519 = vpop.f32.mrf.mxu0
        %v1520 = vadd.f32 0.0, %v1519
        %v1521 = vpop.f32.mrf.mxu0
        %1522 = vdwg.mxu0
        %v1524 = vsel %vm996, %v1083, 0
        %1526 = vmatprep.subr.mxu0 0.0
        %1527 = vmatpush1.msra.mxu0 0.0
        %1528 = vmatprep.subr.mxu0 0.0
        %1529 = vmatpush1.msra.mxu0 0.0
        %1530 = vmatprep.subr.mxu0 0.0
        %1531 = vmatpush1.msra.mxu0 0.0
        %1532 = vmatprep.subr.mxu0 0.0
        %1533 = vmatpush1.msra.mxu0 0.0
        %1534 = vmatprep.subr.mxu0 0.0
        %1535 = vmatpush1.msra.mxu0 0.0
        %1536 = vmatprep.subr.mxu0 0.0
        %1537 = vmatpush1.msra.mxu0 0.0
        %1538 = vmatprep.subr.mxu0 0.0
        %1539 = vmatpush1.msra.mxu0 0.0
        %1540 = vmatprep.subr.mxu0 0.0
        %1541 = vmatpush1.msra.mxu0 0.0
        %1542 = vmatprep.subr.mxu0 0.0
        %1543 = vmatpush1.msra.mxu0 0.0
        %1544 = vmatprep.subr.mxu0 0.0
        %1545 = vmatpush1.msra.mxu0 0.0
        %1546 = vmatprep.subr.mxu0 0.0
        %1547 = vmatpush1.msra.mxu0 0.0
        %1548 = vmatprep.subr.mxu0 0.0
        %1549 = vmatpush1.msra.mxu0 0.0
        %1550 = vmatprep.subr.mxu0 0.0
        %1551 = vmatpush1.msra.mxu0 0.0
        %1552 = vmatprep.subr.mxu0 0.0
        %1553 = vmatpush1.msra.mxu0 0.0
        %1554 = vmatprep.subr.mxu0 0.0
        %1555 = vmatpush1.msra.mxu0 0.0
        %1556 = vmatprep.subr.mxu0 0.0
        %1557 = vmatpush1.msra.mxu0 %v398
        %1558 = vmatprep.subr.mxu0 0.0
        %1559 = vmatpush2.msra.mxu0 0.0
        %1560 = vmatprep.subr.mxu0 0.0
        %1561 = vmatpush2.msra.mxu0 0.0
        %1562 = vmatprep.subr.mxu0 0.0
        %1563 = vmatpush2.msra.mxu0 0.0
        %1564 = vmatprep.subr.mxu0 0.0
        %1565 = vmatpush2.msra.mxu0 0.0
        %1566 = vmatprep.subr.mxu0 0.0
        %1567 = vmatpush2.msra.mxu0 0.0
        %1568 = vmatprep.subr.mxu0 0.0
        %1569 = vmatpush2.msra.mxu0 0.0
        %1570 = vmatprep.subr.mxu0 0.0
        %1571 = vmatpush2.msra.mxu0 0.0
        %1572 = vmatprep.subr.mxu0 0.0
        %1573 = vmatpush2.msra.mxu0 0.0
        %1574 = vmatprep.subr.mxu0 0.0
        %1575 = vmatpush2.msra.mxu0 0.0
        %1576 = vmatprep.subr.mxu0 0.0
        %1577 = vmatpush2.msra.mxu0 0.0
        %1578 = vmatprep.subr.mxu0 0.0
        %1579 = vmatpush2.msra.mxu0 0.0
        %1580 = vmatprep.subr.mxu0 0.0
        %1581 = vmatpush2.msra.mxu0 0.0
        %1582 = vmatprep.subr.mxu0 0.0
        %1583 = vmatpush2.msra.mxu0 0.0
        %1584 = vmatprep.subr.mxu0 0.0
        %1585 = vmatpush2.msra.mxu0 0.0
        %1586 = vmatprep.subr.mxu0 0.0
        %1587 = vmatpush2.msra.mxu0 0.0
        %1588 = vmatprep.subr.mxu0 0.0
        %1589 = vmatpush2.msra.mxu0 0.0
        %1590 = vmatprep.mubr.f32.mxu0 0.0
        %1591 = vmatmul.mubr.f32.gmra.mxu0 %v1524
        %v1592 = vpop.f32.mrf.mxu0
        %v1593 = vadd.f32 0.0, %v1592
        %v1594 = vpop.f32.mrf.mxu0
        %1595 = vdwg.mxu0
        %v1597 = vsel %vm996, %v1084, 0
        %1599 = vmatprep.subr.mxu0 0.0
        %1600 = vmatpush1.msra.mxu0 0.0
        %1601 = vmatprep.subr.mxu0 0.0
        %1602 = vmatpush1.msra.mxu0 0.0
        %1603 = vmatprep.subr.mxu0 0.0
        %1604 = vmatpush1.msra.mxu0 0.0
        %1605 = vmatprep.subr.mxu0 0.0
        %1606 = vmatpush1.msra.mxu0 0.0
        %1607 = vmatprep.subr.mxu0 0.0
        %1608 = vmatpush1.msra.mxu0 0.0
        %1609 = vmatprep.subr.mxu0 0.0
        %1610 = vmatpush1.msra.mxu0 0.0
        %1611 = vmatprep.subr.mxu0 0.0
        %1612 = vmatpush1.msra.mxu0 0.0
        %1613 = vmatprep.subr.mxu0 0.0
        %1614 = vmatpush1.msra.mxu0 0.0
        %1615 = vmatprep.subr.mxu0 0.0
        %1616 = vmatpush1.msra.mxu0 0.0
        %1617 = vmatprep.subr.mxu0 0.0
        %1618 = vmatpush1.msra.mxu0 0.0
        %1619 = vmatprep.subr.mxu0 0.0
        %1620 = vmatpush1.msra.mxu0 0.0
        %1621 = vmatprep.subr.mxu0 0.0
        %1622 = vmatpush1.msra.mxu0 0.0
        %1623 = vmatprep.subr.mxu0 0.0
        %1624 = vmatpush1.msra.mxu0 0.0
        %1625 = vmatprep.subr.mxu0 0.0
        %1626 = vmatpush1.msra.mxu0 0.0
        %1627 = vmatprep.subr.mxu0 0.0
        %1628 = vmatpush1.msra.mxu0 0.0
        %1629 = vmatprep.subr.mxu0 0.0
        %1630 = vmatpush1.msra.mxu0 %v401
        %1631 = vmatprep.subr.mxu0 0.0
        %1632 = vmatpush2.msra.mxu0 0.0
        %1633 = vmatprep.subr.mxu0 0.0
        %1634 = vmatpush2.msra.mxu0 0.0
        %1635 = vmatprep.subr.mxu0 0.0
        %1636 = vmatpush2.msra.mxu0 0.0
        %1637 = vmatprep.subr.mxu0 0.0
        %1638 = vmatpush2.msra.mxu0 0.0
        %1639 = vmatprep.subr.mxu0 0.0
        %1640 = vmatpush2.msra.mxu0 0.0
        %1641 = vmatprep.subr.mxu0 0.0
        %1642 = vmatpush2.msra.mxu0 0.0
        %1643 = vmatprep.subr.mxu0 0.0
        %1644 = vmatpush2.msra.mxu0 0.0
        %1645 = vmatprep.subr.mxu0 0.0
        %1646 = vmatpush2.msra.mxu0 0.0
        %1647 = vmatprep.subr.mxu0 0.0
        %1648 = vmatpush2.msra.mxu0 0.0
        %1649 = vmatprep.subr.mxu0 0.0
        %1650 = vmatpush2.msra.mxu0 0.0
        %1651 = vmatprep.subr.mxu0 0.0
        %1652 = vmatpush2.msra.mxu0 0.0
        %1653 = vmatprep.subr.mxu0 0.0
        %1654 = vmatpush2.msra.mxu0 0.0
        %1655 = vmatprep.subr.mxu0 0.0
        %1656 = vmatpush2.msra.mxu0 0.0
        %1657 = vmatprep.subr.mxu0 0.0
        %1658 = vmatpush2.msra.mxu0 0.0
        %1659 = vmatprep.subr.mxu0 0.0
        %1660 = vmatpush2.msra.mxu0 0.0
        %1661 = vmatprep.subr.mxu0 0.0
        %1662 = vmatpush2.msra.mxu0 0.0
        %1663 = vmatprep.mubr.f32.mxu0 0.0
        %1664 = vmatmul.mubr.f32.gmra.mxu0 %v1597
        %v1665 = vpop.f32.mrf.mxu0
        %v1666 = vadd.f32 0.0, %v1665
        %v1667 = vpop.f32.mrf.mxu0
        %1668 = vdwg.mxu0
        %1670 = vrot.lane.b32.xlu0 %v1228, 16
        %v1671 = vpop.permute.xlu0 %1670
        %1674 = vrot.lane.b32.xlu0 %v1301, 32
        %v1675 = vpop.permute.xlu0 %1674
        %1678 = vrot.lane.b32.xlu0 %v1374, 48
        %v1679 = vpop.permute.xlu0 %1678
        %1682 = vrot.lane.b32.xlu0 %v1447, 64
        %v1683 = vpop.permute.xlu0 %1682
        %1686 = vrot.lane.b32.xlu0 %v1520, 80
        %v1687 = vpop.permute.xlu0 %1686
        %1690 = vrot.lane.b32.xlu0 %v1593, 96
        %v1691 = vpop.permute.xlu0 %1690
        %1694 = vrot.lane.b32.xlu0 %v1666, 112
        %v1695 = vpop.permute.xlu0 %1694
        %v1697 = vsel %vm403, %v1155, %v1671
        %v1698 = vsel %vm206, %v1697, %v1675
        %vm1699 = vcmask 392192
        %v1700 = vsel %vm1699, %v1698, %v1679
        %vm1701 = vcmask 523264
        %v1702 = vsel %vm1701, %v1700, %v1683
        %vm1703 = vcmask 654336
        %v1704 = vsel %vm1703, %v1702, %v1687
        %vm1705 = vcmask 785408
        %v1706 = vsel %vm1705, %v1704, %v1691
        %vm1707 = vcmask 916480
        %v1708 = vsel %vm1707, %v1706, %v1695
        %v1709 = vld [vmem:[%s2] sm:$0xff]
        %v1710 = vld [vmem:[%s2 + $0x8] sm:$0xff]
        %v1711 = vld [vmem:[%s2 + $0x10] sm:$0xff]
        %v1712 = vld [vmem:[%s2 + $0x18] sm:$0xff]
        %v1713 = vld [vmem:[%s2 + $0x20] sm:$0xff]
        %v1714 = vld [vmem:[%s2 + $0x28] sm:$0xff]
        %v1715 = vld [vmem:[%s2 + $0x30] sm:$0xff]
        %v1716 = vld [vmem:[%s2 + $0x38] sm:$0xff]
        %v1717 = vld [vmem:[%s2 + $0x40] sm:$0xff]
        %v1718 = vld [vmem:[%s2 + $0x48] sm:$0xff]
        %v1719 = vld [vmem:[%s2 + $0x50] sm:$0xff]
        %v1720 = vld [vmem:[%s2 + $0x58] sm:$0xff]
        %v1721 = vld [vmem:[%s2 + $0x60] sm:$0xff]
        %v1722 = vld [vmem:[%s2 + $0x68] sm:$0xff]
        %v1723 = vld [vmem:[%s2 + $0x70] sm:$0xff]
        %v1724 = vld [vmem:[%s2 + $0x78] sm:$0xff]
        %v1725 = vld [vmem:[%s3] sm:$0x1]
        %v1727 = vlaneseq
        %v1728 = vshrl.u32 %v1727, 7
        %v1729 = vsub.s32 0, %v1728
        %v1730 = vrot.slane %v1725, %v1729
        %1732 = vmatprep.subr.mxu0 0.0
        %1733 = vmatpush1.msra.mxu0 %v1724
        %1734 = vmatprep.subr.mxu0 0.0
        %1735 = vmatpush1.msra.mxu0 %v1723
        %1736 = vmatprep.subr.mxu0 0.0
        %1737 = vmatpush1.msra.mxu0 %v1722
        %1738 = vmatprep.subr.mxu0 0.0
        %1739 = vmatpush1.msra.mxu0 %v1721
        %1740 = vmatprep.subr.mxu0 0.0
        %1741 = vmatpush1.msra.mxu0 %v1720
        %1742 = vmatprep.subr.mxu0 0.0
        %1743 = vmatpush1.msra.mxu0 %v1719
        %1744 = vmatprep.subr.mxu0 0.0
        %1745 = vmatpush1.msra.mxu0 %v1718
        %1746 = vmatprep.subr.mxu0 0.0
        %1747 = vmatpush1.msra.mxu0 %v1717
        %1748 = vmatprep.subr.mxu0 0.0
        %1749 = vmatpush1.msra.mxu0 %v1716
        %1750 = vmatprep.subr.mxu0 0.0
        %1751 = vmatpush1.msra.mxu0 %v1715
        %1752 = vmatprep.subr.mxu0 0.0
        %1753 = vmatpush1.msra.mxu0 %v1714
        %1754 = vmatprep.subr.mxu0 0.0
        %1755 = vmatpush1.msra.mxu0 %v1713
        %1756 = vmatprep.subr.mxu0 0.0
        %1757 = vmatpush1.msra.mxu0 %v1712
        %1758 = vmatprep.subr.mxu0 0.0
        %1759 = vmatpush1.msra.mxu0 %v1711
        %1760 = vmatprep.subr.mxu0 0.0
        %1761 = vmatpush1.msra.mxu0 %v1710
        %1762 = vmatprep.subr.mxu0 0.0
        %1763 = vmatpush1.msra.mxu0 %v1709
        %1764 = vmatprep.subr.mxu0 0.0
        %1765 = vmatpush2.msra.mxu0 0.0
        %1766 = vmatprep.subr.mxu0 0.0
        %1767 = vmatpush2.msra.mxu0 0.0
        %1768 = vmatprep.subr.mxu0 0.0
        %1769 = vmatpush2.msra.mxu0 0.0
        %1770 = vmatprep.subr.mxu0 0.0
        %1771 = vmatpush2.msra.mxu0 0.0
        %1772 = vmatprep.subr.mxu0 0.0
        %1773 = vmatpush2.msra.mxu0 0.0
        %1774 = vmatprep.subr.mxu0 0.0
        %1775 = vmatpush2.msra.mxu0 0.0
        %1776 = vmatprep.subr.mxu0 0.0
        %1777 = vmatpush2.msra.mxu0 0.0
        %1778 = vmatprep.subr.mxu0 0.0
        %1779 = vmatpush2.msra.mxu0 0.0
        %1780 = vmatprep.subr.mxu0 0.0
        %1781 = vmatpush2.msra.mxu0 0.0
        %1782 = vmatprep.subr.mxu0 0.0
        %1783 = vmatpush2.msra.mxu0 0.0
        %1784 = vmatprep.subr.mxu0 0.0
        %1785 = vmatpush2.msra.mxu0 0.0
        %1786 = vmatprep.subr.mxu0 0.0
        %1787 = vmatpush2.msra.mxu0 0.0
        %1788 = vmatprep.subr.mxu0 0.0
        %1789 = vmatpush2.msra.mxu0 0.0
        %1790 = vmatprep.subr.mxu0 0.0
        %1791 = vmatpush2.msra.mxu0 0.0
        %1792 = vmatprep.subr.mxu0 0.0
        %1793 = vmatpush2.msra.mxu0 0.0
        %1794 = vmatprep.subr.mxu0 0.0
        %1795 = vmatpush2.msra.mxu0 0.0
        %1796 = vmatprep.mubr.f32.mxu0 0.0
        %1797 = vmatmul.mubr.f32.gmra.mxu0 %v1708
        %v1798 = vpop.f32.mrf.mxu0
        %v1799 = vadd.f32 %v1730, %v1798
        %v1800 = vpop.f32.mrf.mxu0
        %1801 = vdwg.mxu0
        %v1803 = vrot.slane %v1799, 1
        %1804 = vrot.lane.b32.xlu0 %v1803, 32
        %v1805 = vpop.permute.xlu0 %1804
        %v1807 = vrot.slane %v1799, 2
        %1808 = vrot.lane.b32.xlu0 %v1807, 64
        %v1809 = vpop.permute.xlu0 %1808
        %v1811 = vrot.slane %v1799, 3
        %1812 = vrot.lane.b32.xlu0 %v1811, 96
        %v1813 = vpop.permute.xlu0 %1812
        %v1815 = vrot.slane %v1799, 4
        %v1817 = vrot.slane %v1799, 5
        %1818 = vrot.lane.b32.xlu0 %v1817, 32
        %v1819 = vpop.permute.xlu0 %1818
        %v1821 = vrot.slane %v1799, 6
        %1822 = vrot.lane.b32.xlu0 %v1821, 64
        %v1823 = vpop.permute.xlu0 %1822
        %v1825 = vrot.slane %v1799, 7
        %1826 = vrot.lane.b32.xlu0 %v1825, 96
        %v1827 = vpop.permute.xlu0 %1826
        %v1829 = vsel %vm206, %v1799, %v1805
        %v1830 = vsel %vm1701, %v1829, %v1809
        %v1831 = vsel %vm1705, %v1830, %v1813
        %v1832 = vsel %vm206, %v1815, %v1819
        %v1833 = vsel %vm1701, %v1832, %v1823
        %v1834 = vsel %vm1705, %v1833, %v1827
        %v1837 = vcombine.low %v1831, %v1834
        %v1839 = vunpack.c.l.s4 1966171168
        %v1840 = vunpack.c.0.s8 %v1839
        %v1841 = vlaneseq
        %v1842 = vshrl.u32 %v1841, 7
        %v1843 = vsub.s32 %v1840, %v1842
        %v1844 = vrot.slane %v1837, %v1843
        %v1846 = vunpack.c.l.s4 1966171168
        %v1847 = vunpack.c.0.s8 %v1846
        %v1848 = vlaneseq
        %v1849 = vshrl.u32 %v1848, 7
        %v1850 = vsub.s32 %v1847, %v1849
        %v1851 = vrot.slane %v1844, %v1850
        %v1853 = vlaneseq
        %vm1854 = vcmp.ge.s32.totalorder %v1853, 0
        %vm1855 = vcmp.lt.s32.totalorder %v1853, 256
        %vm1856 = vmand %vm1854, %vm1855
        %1857 = vst.msk [vmem:[%s188] sm:$0x3] %vm1856, %v1851
        %s1858 = sand.u32 %s115, 1
        %s1859 = scalar_lea.sflag [#allocation3], %s1858
        %s1860 = sand.u32 %s115, 1
        %s1861 = smul.addr %s1860, 2
        %s1862 = scalar_lea.vmem [#allocation2], %s1861
        // Predicated region
        $region37: #{tpu_custom_call.1} parent=35 // pred_check
          %p1863 = pneg %p125
        $region38: #{tpu_custom_call.1} parent=35 // pred_check_branch
          %1865 = sbr.rel (%p1863) target = $region40
        $region39: #{tpu_custom_call.1} parent=35 // pred_region
          %s1867 = ssub.s32 32, 32
          %1868 = vsyncadd %s1859, %s1867
          %s1869 = smul.addr %s18, 2
          %s1870 = smul.addr %s1869, 16
          %s1871 = scalar_lea.hbm %s4, %s1870
          %s1873 = sshll.u32 %s1862, 4
          %s1874 = int_to_ptr.vmem [resolvable:$true] %s1873
          %1876 = dma.vmem_to_hbm [thread:$0]  %s1874, 32, %s1871, %s1859
        $region40: #{tpu_custom_call.1} parent=35 // pred_fallthru
          _
      $region36: #{tpu_custom_call.1} parent=5 // pred_fallthru
        _
      %p1877 = scmp.le.s32.totalorder 2, %s13
      // Predicated region
      $region41: #{tpu_custom_call.1} parent=5 // pred_check
        %p1878 = pneg %p1877
      $region42: #{tpu_custom_call.1} parent=5 // pred_check_branch
        %1880 = sbr.rel (%p1878) target = $region44
      $region43: #{tpu_custom_call.1} parent=5 // pred_region
        %s1881 = ssub.s32 %s13, 2
        // Predicated region
        $region45: #{tpu_custom_call.1} parent=43 // pred_check
          %p1882 = pneg %p131
        $region46: #{tpu_custom_call.1} parent=43 // pred_check_branch
          %1884 = sbr.rel (%p1882) target = $region48
        $region47: #{tpu_custom_call.1} parent=43 // pred_region
          %s1885 = sand.u32 %s116, 1
          %s1886 = scalar_lea.sflag [#allocation3], %s1885
          %s1887 = sand.u32 %s116, 1
          %s1888 = smul.addr %s1887, 2
          %s1889 = scalar_lea.vmem [#allocation2], %s1888
          %1890 = dma.done %s1886, 32
        $region48: #{tpu_custom_call.1} parent=43 // pred_fallthru
          _
      $region44: #{tpu_custom_call.1} parent=5 // pred_fallthru
        _
    $region6: #{tpu_custom_call.1} parent=1 // loop_footer
      %s17 = sadd.s32 1, %s13
    $region7: #{tpu_custom_call.1} parent=1 // loop_footer_branch
      %12 = sbr.rel target = $region3
    $region8: #{tpu_custom_call.1} parent=1 // loop_exit
      _
    %1891 = vsyncpa [#allocation3], 1
    %s1892 = scalar_lea.sflag [#allocation3], 1
    %1893 = vsyncpa %s1892, 1

</llo_original>
